<compile_context>
chip_gen: v5e
topology: v5e:2x2
jax: 0.10.0
libtpu: 0.0.40
codegen_flags: <defaults>
</compile_context>

<pallas_src>
import functools

import jax
import jax.numpy as jnp
from jax.experimental import pallas as pl
from jax.experimental.pallas import tpu as pltpu


def _attention_kernel(x_ref, wq_ref, wk_ref, wv_ref, wp_ref, bp_ref,
                      o_ref, acc_ref, *, tq):
    """One grid step = (batch b, q-row tile qi, head h).

    x_ref  : (1, N, C)  bf16  full sequence of batch b (resident across qi, h)
    wq/wk/wv_ref : (1, C, hd) bf16  per-head projection weights (scale in wq)
    wp_ref : (1, hd, C) bf16  per-head slice of the output projection
    bp_ref : (1, C)     f32   output projection bias
    o_ref  : (1, tq, C)       output tile (written at the last head)
    acc_ref: (tq, C)    f32   head-reduction accumulator (VMEM scratch)
    """
    qi = pl.program_id(1)
    h = pl.program_id(2)

    @pl.when(h == 0)
    def _init():
        acc_ref[...] = jnp.zeros_like(acc_ref)

    x_full = x_ref[0]                                        # (N, C) bf16
    q_start = pl.multiple_of(qi * tq, tq)
    x_q = x_ref[0, pl.ds(q_start, tq), :]                    # (tq, C) bf16

    # Per-head projections: bf16 operands on the MXU, f32 accumulation.
    q = jnp.dot(x_q, wq_ref[0], preferred_element_type=jnp.float32)     # (tq, hd)
    k = jnp.dot(x_full, wk_ref[0], preferred_element_type=jnp.float32)  # (N, hd)
    v = jnp.dot(x_full, wv_ref[0], preferred_element_type=jnp.float32)  # (N, hd)

    # Scores: contract last dims directly (no explicit k.T / XLU transpose).
    s = jax.lax.dot_general(
        q.astype(jnp.bfloat16), k.astype(jnp.bfloat16),
        dimension_numbers=(((1,), (1,)), ((), ())),
        preferred_element_type=jnp.float32)                  # (tq, N) f32

    # Numerically stable softmax in f32; denominator via EUP approx reciprocal.
    s = s - jnp.max(s, axis=-1, keepdims=True)
    p = jnp.exp(s)
    p = p * pl.reciprocal(jnp.sum(p, axis=-1, keepdims=True), approx=True)

    # Weighted values for this head.
    o_h = jnp.dot(p.astype(jnp.bfloat16), v.astype(jnp.bfloat16),
                  preferred_element_type=jnp.float32)        # (tq, hd) f32

    # Fold this head's contribution through its slice of the output projection.
    acc_ref[...] += jnp.dot(o_h.astype(jnp.bfloat16), wp_ref[0],
                            preferred_element_type=jnp.float32)          # (tq, C)

    @pl.when(h == pl.num_programs(2) - 1)
    def _finalize():
        o_ref[0] = (acc_ref[...] + bp_ref[...]).astype(o_ref.dtype)


def prepare_params(w_qkv, w_proj, b_proj, *, num_heads):
    """One-time host-side parameter re-layout (NOT part of the per-call path).

    w_qkv : (C, 3C)  stored (in, out); out columns ordered [q | k | v],
            head-major within each (matches the PyTorch reshape(B,N,3,H,hd)).
    w_proj: (C, C)   stored (in, out); input rows ordered head-major.
    Returns per-head bf16 weight stacks with the softmax scale folded into wq.
    """
    C = w_qkv.shape[0]
    assert C % num_heads == 0
    hd = C // num_heads
    scale = hd ** (-0.5)

    wq = w_qkv[:, 0 * C:1 * C].reshape(C, num_heads, hd).transpose(1, 0, 2)
    wk = w_qkv[:, 1 * C:2 * C].reshape(C, num_heads, hd).transpose(1, 0, 2)
    wv = w_qkv[:, 2 * C:3 * C].reshape(C, num_heads, hd).transpose(1, 0, 2)
    wq = wq * scale                                   # fold q scaling into weights
    wp = w_proj.reshape(num_heads, hd, C)             # (H, hd, C)

    return (wq.astype(jnp.bfloat16), wk.astype(jnp.bfloat16),
            wv.astype(jnp.bfloat16), wp.astype(jnp.bfloat16),
            b_proj.reshape(1, C).astype(jnp.float32))


def attention_pallas(x, params, *, num_heads, q_tile=128):
    """x: (B, N, C) (any float dtype); params from prepare_params()."""
    wq, wk, wv, wp, bp = params
    B, N, C = x.shape
    assert C % num_heads == 0
    hd = C // num_heads

    tq = N if N < q_tile else q_tile
    assert N % tq == 0, "N must be divisible by the q tile size"

    x_bf16 = x.astype(jnp.bfloat16)
    kernel = functools.partial(_attention_kernel, tq=tq)

    return pl.pallas_call(
        kernel,
        out_shape=jax.ShapeDtypeStruct((B, N, C), x.dtype),
        grid_spec=pltpu.PrefetchScalarGridSpec(
            num_scalar_prefetch=0,
            grid=(B, N // tq, num_heads),
            in_specs=[
                pl.BlockSpec((1, N, C), lambda b, qi, h: (b, 0, 0)),    # x (full seq)
                pl.BlockSpec((1, C, hd), lambda b, qi, h: (h, 0, 0)),   # wq[h]
                pl.BlockSpec((1, C, hd), lambda b, qi, h: (h, 0, 0)),   # wk[h]
                pl.BlockSpec((1, C, hd), lambda b, qi, h: (h, 0, 0)),   # wv[h]
                pl.BlockSpec((1, hd, C), lambda b, qi, h: (h, 0, 0)),   # wp[h]
                pl.BlockSpec((1, C), lambda b, qi, h: (0, 0)),          # proj bias
            ],
            out_specs=pl.BlockSpec((1, tq, C), lambda b, qi, h: (b, qi, 0)),
            scratch_shapes=[pltpu.VMEM((tq, C), jnp.float32)],
        ),
        compiler_params=pltpu.CompilerParams(
            dimension_semantics=("parallel", "parallel", "arbitrary")),
    )(x_bf16, wq, wk, wv, wp, bp)


def attention_ref(x, w_qkv, w_proj, b_proj, *, num_heads):
    """Pure-JAX (f32) reference mirroring the PyTorch forward exactly."""
    B, N, C = x.shape
    head_dim = C // num_heads
    scale = head_dim ** (-0.5)
    qkv = x @ w_qkv                                                # (B, N, 3C)
    qkv = qkv.reshape(B, N, 3, num_heads, head_dim).transpose(2, 0, 3, 1, 4)
    q, k, v = qkv[0], qkv[1], qkv[2]                               # (B, H, N, hd)
    q = q * scale
    attn = jnp.einsum('bhqd,bhkd->bhqk', q, k)
    attn = jax.nn.softmax(attn, axis=-1)
    out = jnp.einsum('bhqk,bhkd->bhqd', attn, v)                   # (B, H, N, hd)
    out = out.transpose(0, 2, 1, 3).reshape(B, N, C)
    return out @ w_proj + b_proj


if __name__ == "__main__":
    B, N, C = 2, 128, 256          # lane-friendly small config (hd = 32)
    num_heads = 8

    key = jax.random.PRNGKey(0)
    kx, kq, kp, kb = jax.random.split(key, 4)

    x = jax.random.normal(kx, (B, N, C), dtype=jnp.float32)
    # Deterministic synthetic parameters, stored as (in, out).
    w_qkv = jax.random.normal(kq, (C, 3 * C), dtype=jnp.float32) * 0.05
    w_proj = jax.random.normal(kp, (C, C), dtype=jnp.float32) * 0.05
    b_proj = jax.random.normal(kb, (C,), dtype=jnp.float32) * 0.05

    params = prepare_params(w_qkv, w_proj, b_proj, num_heads=num_heads)

    out = attention_pallas(x, params, num_heads=num_heads)
    out = jax.block_until_ready(out)

    ref = attention_ref(x, w_qkv, w_proj, b_proj, num_heads=num_heads)
    assert out.shape == (B, N, C)
    # bf16 MXU operands + approx reciprocal => slightly looser tolerance vs f32 ref.
    assert jnp.allclose(out, ref, atol=5e-2, rtol=5e-2), "mismatch vs reference"

    print("KERNEL_OK")
</pallas_src>

<mosaic_0001>
module attributes {stable_mosaic.version = 11 : i64} {
  func.func @_attention_kernel(%arg0: i32, %arg1: i32, %arg2: i32, %arg3: memref<1x128x256xbf16, #tpu.memory_space<vmem>>, %arg4: memref<1x256x32xbf16, #tpu.memory_space<vmem>>, %arg5: memref<1x256x32xbf16, #tpu.memory_space<vmem>>, %arg6: memref<1x256x32xbf16, #tpu.memory_space<vmem>>, %arg7: memref<1x32x256xbf16, #tpu.memory_space<vmem>>, %arg8: memref<1x256xf32, #tpu.memory_space<vmem>>, %arg9: memref<1x128x256xf32, #tpu.memory_space<vmem>>, %arg10: memref<128x256xf32, #tpu.memory_space<vmem>>) attributes {dimension_semantics = [#tpu.dimension_semantics<parallel>, #tpu.dimension_semantics<parallel>, #tpu.dimension_semantics<arbitrary>], iteration_bounds = array<i64: 2, 1, 8>, scalar_prefetch = 0 : i64, scratch_operands = 1 : i64, tpu.core_type = #tpu.core_type<tc>, window_params = [{transform_indices = @transform_0, window_bounds = array<i64: 1, 128, 256>}, {transform_indices = @transform_1, window_bounds = array<i64: 1, 256, 32>}, {transform_indices = @transform_2, window_bounds = array<i64: 1, 256, 32>}, {transform_indices = @transform_3, window_bounds = array<i64: 1, 256, 32>}, {transform_indices = @transform_4, window_bounds = array<i64: 1, 32, 256>}, {pipeline_mode = #tpu.pipeline_mode<synchronous>, transform_indices = @transform_5, window_bounds = array<i64: 1, 256>}, {transform_indices = @transform_6, window_bounds = array<i64: 1, 128, 256>}]} {
    %c0_i32 = arith.constant 0 : i32
    %0 = arith.cmpi eq, %arg2, %c0_i32 : i32
    %1 = arith.extui %0 : i1 to i32
    %c0_i32_0 = arith.constant 0 : i32
    %2 = arith.cmpi ne, %1, %c0_i32_0 : i32
    scf.if %2 {
      %cst_29 = arith.constant 0.000000e+00 : f32
      %45 = vector.broadcast %cst_29 : f32 to vector<128x256xf32>
      %c0_30 = arith.constant 0 : index
      %c0_31 = arith.constant 0 : index
      %46 = vector.load %arg10[%c0_30, %c0_31] : memref<128x256xf32, #tpu.memory_space<vmem>>, vector<128x256xf32>
      tpu.vector_store %arg10[%c0_30, %c0_31], %45 {strides = array<i32>} : memref<128x256xf32, #tpu.memory_space<vmem>>, vector<128x256xf32>,
    } else {
    }
    %c0 = arith.constant 0 : index
    %c0_1 = arith.constant 0 : index
    %c0_2 = arith.constant 0 : index
    %3 = vector.load %arg3[%c0, %c0_1, %c0_2] : memref<1x128x256xbf16, #tpu.memory_space<vmem>>, vector<1x128x256xbf16>
    %4 = vector.shape_cast %3 : vector<1x128x256xbf16> to vector<128x256xbf16>
    %c128_i32 = arith.constant 128 : i32
    %5 = arith.muli %arg1, %c128_i32 : i32
    %6 = tpu.assume_multiple %5, 128 : i32
    %c0_3 = arith.constant 0 : index
    %7 = arith.index_cast %6 : i32 to index
    %c0_4 = arith.constant 0 : index
    %8 = vector.load %arg3[%c0_3, %7, %c0_4] : memref<1x128x256xbf16, #tpu.memory_space<vmem>>, vector<1x128x256xbf16>
    %9 = vector.shape_cast %8 : vector<1x128x256xbf16> to vector<128x256xbf16>
    %c0_5 = arith.constant 0 : index
    %c0_6 = arith.constant 0 : index
    %c0_7 = arith.constant 0 : index
    %10 = vector.load %arg4[%c0_5, %c0_6, %c0_7] : memref<1x256x32xbf16, #tpu.memory_space<vmem>>, vector<1x256x32xbf16>
    %11 = vector.shape_cast %10 : vector<1x256x32xbf16> to vector<256x32xbf16>
    %cst = arith.constant dense<0.000000e+00> : vector<128x32xf32>
    %12 = tpu.matmul %9, %11, %cst {dimension_numbers = #tpu.dot_dimension_numbers<[1], [0], [0], [1], [0, 0, 1, 1], [], []>} : vector<128x256xbf16>, vector<256x32xbf16>, vector<128x32xf32> -> vector<128x32xf32>
    %c0_8 = arith.constant 0 : index
    %c0_9 = arith.constant 0 : index
    %c0_10 = arith.constant 0 : index
    %13 = vector.load %arg5[%c0_8, %c0_9, %c0_10] : memref<1x256x32xbf16, #tpu.memory_space<vmem>>, vector<1x256x32xbf16>
    %14 = vector.shape_cast %13 : vector<1x256x32xbf16> to vector<256x32xbf16>
    %cst_11 = arith.constant dense<0.000000e+00> : vector<128x32xf32>
    %15 = tpu.matmul %4, %14, %cst_11 {dimension_numbers = #tpu.dot_dimension_numbers<[1], [0], [0], [1], [0, 0, 1, 1], [], []>} : vector<128x256xbf16>, vector<256x32xbf16>, vector<128x32xf32> -> vector<128x32xf32>
    %c0_12 = arith.constant 0 : index
    %c0_13 = arith.constant 0 : index
    %c0_14 = arith.constant 0 : index
    %16 = vector.load %arg6[%c0_12, %c0_13, %c0_14] : memref<1x256x32xbf16, #tpu.memory_space<vmem>>, vector<1x256x32xbf16>
    %17 = vector.shape_cast %16 : vector<1x256x32xbf16> to vector<256x32xbf16>
    %cst_15 = arith.constant dense<0.000000e+00> : vector<128x32xf32>
    %18 = tpu.matmul %4, %17, %cst_15 {dimension_numbers = #tpu.dot_dimension_numbers<[1], [0], [0], [1], [0, 0, 1, 1], [], []>} : vector<128x256xbf16>, vector<256x32xbf16>, vector<128x32xf32> -> vector<128x32xf32>
    %19 = arith.truncf %12 : vector<128x32xf32> to vector<128x32xbf16>
    %20 = arith.truncf %15 : vector<128x32xf32> to vector<128x32xbf16>
    %cst_16 = arith.constant dense<0.000000e+00> : vector<128x128xf32>
    %21 = tpu.matmul %19, %20, %cst_16 {dimension_numbers = #tpu.dot_dimension_numbers<[1], [1], [0], [0], [0, 0, 1, 0], [], []>} : vector<128x32xbf16>, vector<128x32xbf16>, vector<128x128xf32> -> vector<128x128xf32>
    %cst_17 = arith.constant dense<0xFF800000> : vector<128xf32>
    %22 = vector.multi_reduction <maximumf>, %21, %cst_17 [1] : vector<128x128xf32> to vector<128xf32>
    %23 = vector.shape_cast %22 : vector<128xf32> to vector<128x1xf32>
    %24 = vector.broadcast %23 : vector<128x1xf32> to vector<128x128xf32>
    %25 = arith.subf %21, %24 : vector<128x128xf32>
    %26 = math.exp %25 : vector<128x128xf32>
    %cst_18 = arith.constant dense<0.000000e+00> : vector<128xf32>
    %27 = vector.multi_reduction <add>, %26, %cst_18 [1] : vector<128x128xf32> to vector<128xf32>
    %28 = vector.shape_cast %27 : vector<128xf32> to vector<128x1xf32>
    %29 = tpu.reciprocal %28 {approx = true} : vector<128x1xf32> -> vector<128x1xf32>
    %30 = vector.broadcast %29 : vector<128x1xf32> to vector<128x128xf32>
    %31 = arith.mulf %26, %30 : vector<128x128xf32>
    %32 = arith.truncf %31 : vector<128x128xf32> to vector<128x128xbf16>
    %33 = arith.truncf %18 : vector<128x32xf32> to vector<128x32xbf16>
    %cst_19 = arith.constant dense<0.000000e+00> : vector<128x32xf32>
    %34 = tpu.matmul %32, %33, %cst_19 {dimension_numbers = #tpu.dot_dimension_numbers<[1], [0], [0], [1], [0, 0, 1, 1], [], []>} : vector<128x128xbf16>, vector<128x32xbf16>, vector<128x32xf32> -> vector<128x32xf32>
    %c0_20 = arith.constant 0 : index
    %c0_21 = arith.constant 0 : index
    %35 = vector.load %arg10[%c0_20, %c0_21] : memref<128x256xf32, #tpu.memory_space<vmem>>, vector<128x256xf32>
    %36 = arith.truncf %34 : vector<128x32xf32> to vector<128x32xbf16>
    %c0_22 = arith.constant 0 : index
    %c0_23 = arith.constant 0 : index
    %c0_24 = arith.constant 0 : index
    %37 = vector.load %arg7[%c0_22, %c0_23, %c0_24] : memref<1x32x256xbf16, #tpu.memory_space<vmem>>, vector<1x32x256xbf16>
    %38 = vector.shape_cast %37 : vector<1x32x256xbf16> to vector<32x256xbf16>
    %cst_25 = arith.constant dense<0.000000e+00> : vector<128x256xf32>
    %39 = tpu.matmul %36, %38, %cst_25 {dimension_numbers = #tpu.dot_dimension_numbers<[1], [0], [0], [1], [0, 0, 1, 1], [], []>} : vector<128x32xbf16>, vector<32x256xbf16>, vector<128x256xf32> -> vector<128x256xf32>
    %40 = arith.addf %35, %39 : vector<128x256xf32>
    %c0_26 = arith.constant 0 : index
    %c0_27 = arith.constant 0 : index
    %41 = vector.load %arg10[%c0_26, %c0_27] : memref<128x256xf32, #tpu.memory_space<vmem>>, vector<128x256xf32>
    tpu.vector_store %arg10[%c0_26, %c0_27], %40 {strides = array<i32>} : memref<128x256xf32, #tpu.memory_space<vmem>>, vector<128x256xf32>,
    %c7_i32 = arith.constant 7 : i32
    %42 = arith.cmpi eq, %arg2, %c7_i32 : i32
    %43 = arith.extui %42 : i1 to i32
    %c0_i32_28 = arith.constant 0 : i32
    %44 = arith.cmpi ne, %43, %c0_i32_28 : i32
    scf.if %44 {
      %c0_29 = arith.constant 0 : index
      %c0_30 = arith.constant 0 : index
      %45 = vector.load %arg10[%c0_29, %c0_30] : memref<128x256xf32, #tpu.memory_space<vmem>>, vector<128x256xf32>
      %c0_31 = arith.constant 0 : index
      %c0_32 = arith.constant 0 : index
      %46 = vector.load %arg8[%c0_31, %c0_32] : memref<1x256xf32, #tpu.memory_space<vmem>>, vector<1x256xf32>
      %47 = vector.broadcast %46 : vector<1x256xf32> to vector<128x256xf32>
      %48 = arith.addf %45, %47 : vector<128x256xf32>
      %c0_33 = arith.constant 0 : index
      %c0_34 = arith.constant 0 : index
      %c0_35 = arith.constant 0 : index
      %49 = vector.load %arg9[%c0_33, %c0_34, %c0_35] : memref<1x128x256xf32, #tpu.memory_space<vmem>>, vector<1x128x256xf32>
      %50 = vector.shape_cast %49 : vector<1x128x256xf32> to vector<128x256xf32>
      %51 = vector.shape_cast %48 : vector<128x256xf32> to vector<1x128x256xf32>
      tpu.vector_store %arg9[%c0_33, %c0_34, %c0_35], %51 {strides = array<i32>} : memref<1x128x256xf32, #tpu.memory_space<vmem>>, vector<1x128x256xf32>,
    } else {
    }
    return
  }
  func.func @transform_0(%arg0: i32, %arg1: i32, %arg2: i32) -> (i32, i32, i32) {
    %c0_i32 = arith.constant 0 : i32
    %c0_i32_0 = arith.constant 0 : i32
    %c0_i32_1 = arith.constant 0 : i32
    return %arg0, %c0_i32, %c0_i32_0 : i32, i32, i32
  }
  func.func @transform_1(%arg0: i32, %arg1: i32, %arg2: i32) -> (i32, i32, i32) {
    %c0_i32 = arith.constant 0 : i32
    %c0_i32_0 = arith.constant 0 : i32
    %c0_i32_1 = arith.constant 0 : i32
    return %arg2, %c0_i32, %c0_i32_0 : i32, i32, i32
  }
  func.func @transform_2(%arg0: i32, %arg1: i32, %arg2: i32) -> (i32, i32, i32) {
    %c0_i32 = arith.constant 0 : i32
    %c0_i32_0 = arith.constant 0 : i32
    %c0_i32_1 = arith.constant 0 : i32
    return %arg2, %c0_i32, %c0_i32_0 : i32, i32, i32
  }
  func.func @transform_3(%arg0: i32, %arg1: i32, %arg2: i32) -> (i32, i32, i32) {
    %c0_i32 = arith.constant 0 : i32
    %c0_i32_0 = arith.constant 0 : i32
    %c0_i32_1 = arith.constant 0 : i32
    return %arg2, %c0_i32, %c0_i32_0 : i32, i32, i32
  }
  func.func @transform_4(%arg0: i32, %arg1: i32, %arg2: i32) -> (i32, i32, i32) {
    %c0_i32 = arith.constant 0 : i32
    %c0_i32_0 = arith.constant 0 : i32
    %c0_i32_1 = arith.constant 0 : i32
    return %arg2, %c0_i32, %c0_i32_0 : i32, i32, i32
  }
  func.func @transform_5(%arg0: i32, %arg1: i32, %arg2: i32) -> (i32, i32) {
    %c0_i32 = arith.constant 0 : i32
    %c0_i32_0 = arith.constant 0 : i32
    %c0_i32_1 = arith.constant 0 : i32
    return %c0_i32, %c0_i32_0 : i32, i32
  }
  func.func @transform_6(%arg0: i32, %arg1: i32, %arg2: i32) -> (i32, i32, i32) {
    %c0_i32 = arith.constant 0 : i32
    %c0_i32_0 = arith.constant 0 : i32
    return %arg0, %arg1, %c0_i32 : i32, i32, i32
  }
}

</mosaic_0001>

<llo_original>
// kernel: tpu_custom_call.1
$region0: #{tpu_custom_call.1}
  #allocation0 [shape = 'u32[]', space=smem, size = 0x4, offset = 0x4, fixed_abs, tag = 'smem constant byte address 0x4 - core index']
  #allocation1 [shape = 'u32[72,128]{1,0:T(1,128)}', space=vmem, size = 0x9000, scoped, tag = 'internal scratch']
  #allocation2 [shape = 'f32[128,256]{1,0:T(8,128)}', space=vmem, size = 0x20000, scoped, tag = 'scratch operand']
  %s0 = inlined_call_operand.vmem [shape: bf16[2,128,256], index: 0, kind: input, shape index: {}]
  %s1 = inlined_call_operand.vmem [shape: bf16[8,256,32], index: 1, kind: input, shape index: {}]
  %s2 = inlined_call_operand.vmem [shape: bf16[8,256,32], index: 2, kind: input, shape index: {}]
  %s3 = inlined_call_operand.vmem [shape: bf16[8,256,32], index: 3, kind: input, shape index: {}]
  %s4 = inlined_call_operand.vmem [shape: bf16[8,32,256], index: 4, kind: input, shape index: {}]
  %s5 = inlined_call_operand.vmem [shape: f32[1,256], index: 5, kind: input, shape index: {}]
  %s6 = inlined_call_operand.hbm [shape: f32[2,128,256], index: 6, kind: output, shape index: {}]
  %s7 = sld [smem:[#allocation0]]
  $region65: #{tpu_custom_call.1} parent=0
    _
  %s9 = ssub.s32 1, %s7
  %s10 = scalar_select 0, %s9, %s7
  $region1: #{tpu_custom_call.1} parent=0
    #allocation3 [shape = 'u8[262144]{0}', space=vmem, size = 0x40000, scoped, tag = 'output window, operand 0']
    #allocation4 [shape = 's32[2]{0}', space=sflag, size = 0x8, scoped, tag = 'scoped memory for tpu_custom_call.1']
    %11 = vsyncpa [#allocation4], 0
    %s12 = scalar_lea.sflag [#allocation4], 1
    %13 = vsyncpa %s12, 0
    loop: start=0, step=1, limit=18
    $region2: #{tpu_custom_call.1} parent=1 // loop_pre_header
      _
    $region3: #{tpu_custom_call.1} parent=1 // loop_header
      %s15 = sphi 0, %s19
      %p16 = scmp.ge.s32.totalorder %s15, 18
      %s22 = sphi 0, %s41
      %s23 = sphi 0, %s37
      %s24 = sphi 0, %s33
      %s25 = sphi 0, %s22
      %s26 = sphi 0, %s23
      %s27 = sphi 0, %s24
      %s28 = sphi 0, %s25
      %s29 = sphi 0, %s26
      %s30 = sphi 0, %s27
      %s44 = sphi 0, %s46
      %s47 = sphi 0, %s44
      %s48 = sphi 0, %s47
      %s64 = sphi 0, %s48
      %s70 = sphi 0, %s72
      %s73 = sphi 0, %s70
      %s74 = sphi 0, %s73
      %s90 = sphi 0, %s74
      %s96 = sphi 0, %s98
      %s99 = sphi 0, %s96
      %s100 = sphi 0, %s99
      %s116 = sphi 0, %s100
      %s122 = sphi 0, %s124
      %s125 = sphi 0, %s122
      %s126 = sphi 0, %s125
      %s142 = sphi 0, %s126
      %s148 = sphi 0, %s150
      %s151 = sphi 0, %s148
      %s152 = sphi 0, %s151
      %s168 = sphi 0, %s152
      %s172 = sphi 0, %s172
      %s174 = sphi 0, %s172
      %s175 = sphi 0, %s174
      %s189 = sphi 0, %s175
      %s197 = sphi 0, %s199
      %s200 = sphi 0, %s197
      %s201 = sphi 0, %s200
      %s217 = sphi 0, %s201
    $region4: #{tpu_custom_call.1} parent=1 // loop_header_branch
      %18 = sbr.rel (%p16) target = $region8
    $region5: #{tpu_custom_call.1} parent=1 // loop_body
      %s20 = ssub.s32 %s15, 1
      %s21 = ssub.s32 %s15, 2
      %s31 = sadd.s32 1, %s24
      %p32 = scmp.ge.s32.totalorder %s31, 8
      %s33 = scalar_select %p32, 0, %s31
      %s34 = sadd.s32 1, %s23
      %s35 = scalar_select %p32, %s34, %s23
      %p36 = scmp.ge.s32.totalorder %s35, 1
      %s37 = scalar_select %p36, 0, %s35
      %s38 = sadd.s32 1, %s22
      %s39 = scalar_select %p36, %s38, %s22
      %p40 = scmp.ge.s32.totalorder %s39, 2
      %s41 = scalar_select %p40, 0, %s39
      %s42 = ssub.s32 %s22, %s41
      %p43 = scmp.eq.s32.totalorder %s42, 0
      %s45 = sadd.s32 %s44, 1
      %s46 = scalar_select %p43, %s44, %s45
      %p49 = pneg %p43
      %p50 = scmp.eq.s32.totalorder %s15, 15
      %p51 = por %p49, %p50
      %p52 = scmp.ne.s32.totalorder %s44, %s47
      %p53 = scmp.eq.s32.totalorder %s15, 0
      %p54 = por %p52, %p53
      %p55 = scmp.ne.s32.totalorder %s44, %s47
      %p56 = scmp.eq.s32.totalorder %s20, 15
      %p57 = por %p55, %p56
      %p58 = scmp.ne.s32.totalorder %s47, %s48
      %p59 = scmp.eq.s32.totalorder %s20, 0
      %p60 = por %p58, %p59
      %p61 = scmp.ne.s32.totalorder %s47, %s48
      %p62 = scmp.eq.s32.totalorder %s21, 15
      %p63 = por %p61, %p62
      %p65 = scmp.ne.s32.totalorder %s48, %s64
      %p66 = scmp.eq.s32.totalorder %s21, 0
      %p67 = por %p65, %p66
      %s68 = ssub.s32 %s24, %s33
      %p69 = scmp.eq.s32.totalorder %s68, 0
      %s71 = sadd.s32 %s70, 1
      %s72 = scalar_select %p69, %s70, %s71
      %p75 = pneg %p69
      %p76 = scmp.eq.s32.totalorder %s15, 15
      %p77 = por %p75, %p76
      %p78 = scmp.ne.s32.totalorder %s70, %s73
      %p79 = scmp.eq.s32.totalorder %s15, 0
      %p80 = por %p78, %p79
      %p81 = scmp.ne.s32.totalorder %s70, %s73
      %p82 = scmp.eq.s32.totalorder %s20, 15
      %p83 = por %p81, %p82
      %p84 = scmp.ne.s32.totalorder %s73, %s74
      %p85 = scmp.eq.s32.totalorder %s20, 0
      %p86 = por %p84, %p85
      %p87 = scmp.ne.s32.totalorder %s73, %s74
      %p88 = scmp.eq.s32.totalorder %s21, 15
      %p89 = por %p87, %p88
      %p91 = scmp.ne.s32.totalorder %s74, %s90
      %p92 = scmp.eq.s32.totalorder %s21, 0
      %p93 = por %p91, %p92
      %s94 = ssub.s32 %s24, %s33
      %p95 = scmp.eq.s32.totalorder %s94, 0
      %s97 = sadd.s32 %s96, 1
      %s98 = scalar_select %p95, %s96, %s97
      %p101 = pneg %p95
      %p102 = scmp.eq.s32.totalorder %s15, 15
      %p103 = por %p101, %p102
      %p104 = scmp.ne.s32.totalorder %s96, %s99
      %p105 = scmp.eq.s32.totalorder %s15, 0
      %p106 = por %p104, %p105
      %p107 = scmp.ne.s32.totalorder %s96, %s99
      %p108 = scmp.eq.s32.totalorder %s20, 15
      %p109 = por %p107, %p108
      %p110 = scmp.ne.s32.totalorder %s99, %s100
      %p111 = scmp.eq.s32.totalorder %s20, 0
      %p112 = por %p110, %p111
      %p113 = scmp.ne.s32.totalorder %s99, %s100
      %p114 = scmp.eq.s32.totalorder %s21, 15
      %p115 = por %p113, %p114
      %p117 = scmp.ne.s32.totalorder %s100, %s116
      %p118 = scmp.eq.s32.totalorder %s21, 0
      %p119 = por %p117, %p118
      %s120 = ssub.s32 %s24, %s33
      %p121 = scmp.eq.s32.totalorder %s120, 0
      %s123 = sadd.s32 %s122, 1
      %s124 = scalar_select %p121, %s122, %s123
      %p127 = pneg %p121
      %p128 = scmp.eq.s32.totalorder %s15, 15
      %p129 = por %p127, %p128
      %p130 = scmp.ne.s32.totalorder %s122, %s125
      %p131 = scmp.eq.s32.totalorder %s15, 0
      %p132 = por %p130, %p131
      %p133 = scmp.ne.s32.totalorder %s122, %s125
      %p134 = scmp.eq.s32.totalorder %s20, 15
      %p135 = por %p133, %p134
      %p136 = scmp.ne.s32.totalorder %s125, %s126
      %p137 = scmp.eq.s32.totalorder %s20, 0
      %p138 = por %p136, %p137
      %p139 = scmp.ne.s32.totalorder %s125, %s126
      %p140 = scmp.eq.s32.totalorder %s21, 15
      %p141 = por %p139, %p140
      %p143 = scmp.ne.s32.totalorder %s126, %s142
      %p144 = scmp.eq.s32.totalorder %s21, 0
      %p145 = por %p143, %p144
      %s146 = ssub.s32 %s24, %s33
      %p147 = scmp.eq.s32.totalorder %s146, 0
      %s149 = sadd.s32 %s148, 1
      %s150 = scalar_select %p147, %s148, %s149
      %p153 = pneg %p147
      %p154 = scmp.eq.s32.totalorder %s15, 15
      %p155 = por %p153, %p154
      %p156 = scmp.ne.s32.totalorder %s148, %s151
      %p157 = scmp.eq.s32.totalorder %s15, 0
      %p158 = por %p156, %p157
      %p159 = scmp.ne.s32.totalorder %s148, %s151
      %p160 = scmp.eq.s32.totalorder %s20, 15
      %p161 = por %p159, %p160
      %p162 = scmp.ne.s32.totalorder %s151, %s152
      %p163 = scmp.eq.s32.totalorder %s20, 0
      %p164 = por %p162, %p163
      %p165 = scmp.ne.s32.totalorder %s151, %s152
      %p166 = scmp.eq.s32.totalorder %s21, 15
      %p167 = por %p165, %p166
      %p169 = scmp.ne.s32.totalorder %s152, %s168
      %p170 = scmp.eq.s32.totalorder %s21, 0
      %p171 = por %p169, %p170
      %s173 = sadd.s32 %s172, 1
      %p176 = scmp.eq.s32.totalorder %s15, 15
      %p177 = scmp.ne.s32.totalorder %s172, %s174
      %p178 = scmp.eq.s32.totalorder %s15, 0
      %p179 = por %p177, %p178
      %p180 = scmp.ne.s32.totalorder %s172, %s174
      %p181 = scmp.eq.s32.totalorder %s20, 15
      %p182 = por %p180, %p181
      %p183 = scmp.ne.s32.totalorder %s174, %s175
      %p184 = scmp.eq.s32.totalorder %s20, 0
      %p185 = por %p183, %p184
      %p186 = scmp.ne.s32.totalorder %s174, %s175
      %p187 = scmp.eq.s32.totalorder %s21, 15
      %p188 = por %p186, %p187
      %p190 = scmp.ne.s32.totalorder %s175, %s189
      %p191 = scmp.eq.s32.totalorder %s21, 0
      %p192 = por %p190, %p191
      %s193 = ssub.s32 %s22, %s41
      %s194 = ssub.s32 %s23, %s37
      %s195 = sor.u32 %s193, %s194
      %p196 = scmp.eq.s32.totalorder %s195, 0
      %s198 = sadd.s32 %s197, 1
      %s199 = scalar_select %p196, %s197, %s198
      %p202 = pneg %p196
      %p203 = scmp.eq.s32.totalorder %s15, 15
      %p204 = por %p202, %p203
      %p205 = scmp.ne.s32.totalorder %s197, %s200
      %p206 = scmp.eq.s32.totalorder %s15, 0
      %p207 = por %p205, %p206
      %p208 = scmp.ne.s32.totalorder %s197, %s200
      %p209 = scmp.eq.s32.totalorder %s20, 15
      %p210 = por %p208, %p209
      %p211 = scmp.ne.s32.totalorder %s200, %s201
      %p212 = scmp.eq.s32.totalorder %s20, 0
      %p213 = por %p211, %p212
      %p214 = scmp.ne.s32.totalorder %s200, %s201
      %p215 = scmp.eq.s32.totalorder %s21, 15
      %p216 = por %p214, %p215
      %p218 = scmp.ne.s32.totalorder %s201, %s217
      %p219 = scmp.eq.s32.totalorder %s21, 0
      %p220 = por %p218, %p219
      %p221 = scmp.le.s32.totalorder 1, %s15
      %p222 = scmp.lt.s32.totalorder %s15, 17
      %p223 = pnand %p221, %p222
      %p224 = pneg %p223
      // Predicated region
      $region9: #{tpu_custom_call.1} parent=5 // pred_check
        _
      $region10: #{tpu_custom_call.1} parent=5 // pred_check_branch
        %226 = sbr.rel (%p223) target = $region12
      $region11: #{tpu_custom_call.1} parent=5 // pred_region
        %s227 = ssub.s32 %s15, 1
        // Predicated region
        $region13: #{tpu_custom_call.1} parent=11 // pred_check
          %p228 = pneg %p185
        $region14: #{tpu_custom_call.1} parent=11 // pred_check_branch
          %230 = sbr.rel (%p228) target = $region16
        $region15: #{tpu_custom_call.1} parent=11 // pred_region
          _
        $region16: #{tpu_custom_call.1} parent=11 // pred_fallthru
          _
      $region12: #{tpu_custom_call.1} parent=5 // pred_fallthru
        _
      %p231 = scmp.lt.s32.totalorder %s15, 16
      // Predicated region
      $region17: #{tpu_custom_call.1} parent=5 // pred_check
        %p232 = pneg %p231
      $region18: #{tpu_custom_call.1} parent=5 // pred_check_branch
        %234 = sbr.rel (%p232) target = $region20
      $region19: #{tpu_custom_call.1} parent=5 // pred_region
        // Predicated region
        $region21: #{tpu_custom_call.1} parent=19 // pred_check
          %p235 = pneg %p54
        $region22: #{tpu_custom_call.1} parent=19 // pred_check_branch
          %237 = sbr.rel (%p235) target = $region24
        $region23: #{tpu_custom_call.1} parent=19 // pred_region
          %p238 = scmp.lt.s32.totalorder %s22, 1
          %s239 = scalar_select %p238, %s22, 1
          %s240 = smul.addr %s239, 32
          %s241 = smul.addr %s240, 4
          %s242 = scalar_lea.vmem %s0, %s241
        $region24: #{tpu_custom_call.1} parent=19 // pred_fallthru
          _
        // Predicated region
        $region25: #{tpu_custom_call.1} parent=19 // pred_check
          %p243 = pneg %p80
        $region26: #{tpu_custom_call.1} parent=19 // pred_check_branch
          %245 = sbr.rel (%p243) target = $region28
        $region27: #{tpu_custom_call.1} parent=19 // pred_region
          %p246 = scmp.lt.s32.totalorder %s24, 7
          %s247 = scalar_select %p246, %s24, 7
          %s248 = smul.addr %s247, 32
          %s249 = smul.addr %s248, 4
          %s250 = scalar_lea.vmem %s1, %s249
        $region28: #{tpu_custom_call.1} parent=19 // pred_fallthru
          _
        // Predicated region
        $region29: #{tpu_custom_call.1} parent=19 // pred_check
          %p251 = pneg %p106
        $region30: #{tpu_custom_call.1} parent=19 // pred_check_branch
          %253 = sbr.rel (%p251) target = $region32
        $region31: #{tpu_custom_call.1} parent=19 // pred_region
          %p254 = scmp.lt.s32.totalorder %s24, 7
          %s255 = scalar_select %p254, %s24, 7
          %s256 = smul.addr %s255, 32
          %s257 = smul.addr %s256, 4
          %s258 = scalar_lea.vmem %s2, %s257
        $region32: #{tpu_custom_call.1} parent=19 // pred_fallthru
          _
        // Predicated region
        $region33: #{tpu_custom_call.1} parent=19 // pred_check
          %p259 = pneg %p132
        $region34: #{tpu_custom_call.1} parent=19 // pred_check_branch
          %261 = sbr.rel (%p259) target = $region36
        $region35: #{tpu_custom_call.1} parent=19 // pred_region
          %p262 = scmp.lt.s32.totalorder %s24, 7
          %s263 = scalar_select %p262, %s24, 7
          %s264 = smul.addr %s263, 32
          %s265 = smul.addr %s264, 4
          %s266 = scalar_lea.vmem %s3, %s265
        $region36: #{tpu_custom_call.1} parent=19 // pred_fallthru
          _
        // Predicated region
        $region37: #{tpu_custom_call.1} parent=19 // pred_check
          %p267 = pneg %p158
        $region38: #{tpu_custom_call.1} parent=19 // pred_check_branch
          %269 = sbr.rel (%p267) target = $region40
        $region39: #{tpu_custom_call.1} parent=19 // pred_region
          %p270 = scmp.lt.s32.totalorder %s24, 7
          %s271 = scalar_select %p270, %s24, 7
          %s272 = smul.addr %s271, 8
          %s273 = smul.addr %s272, 4
          %s274 = scalar_lea.vmem %s4, %s273
        $region40: #{tpu_custom_call.1} parent=19 // pred_fallthru
          _
      $region20: #{tpu_custom_call.1} parent=5 // pred_fallthru
        _
      %p275 = scmp.le.s32.totalorder 1, %s15
      %p276 = scmp.lt.s32.totalorder %s15, 17
      %p277 = pnand %p275, %p276
      %p278 = pneg %p277
      // Predicated region
      $region41: #{tpu_custom_call.1} parent=5 // pred_check
        _
      $region42: #{tpu_custom_call.1} parent=5 // pred_check_branch
        %280 = sbr.rel (%p277) target = $region44
      $region43: #{tpu_custom_call.1} parent=5 // pred_region
        %s281 = ssub.s32 %s15, 1
        %p282 = scmp.lt.s32.totalorder %s25, 1
        %s283 = scalar_select %p282, %s25, 1
        %s284 = smul.addr %s283, 32
        %s285 = smul.addr %s284, 4
        %s286 = scalar_lea.vmem %s0, %s285
        %p287 = pneg %p60
        %p288 = pneg %p57
        %p289 = scmp.lt.s32.totalorder %s27, 7
        %s290 = scalar_select %p289, %s27, 7
        %s291 = smul.addr %s290, 32
        %s292 = smul.addr %s291, 4
        %s293 = scalar_lea.vmem %s1, %s292
        %p294 = pneg %p86
        %p295 = pneg %p83
        %p296 = scmp.lt.s32.totalorder %s27, 7
        %s297 = scalar_select %p296, %s27, 7
        %s298 = smul.addr %s297, 32
        %s299 = smul.addr %s298, 4
        %s300 = scalar_lea.vmem %s2, %s299
        %p301 = pneg %p112
        %p302 = pneg %p109
        %p303 = scmp.lt.s32.totalorder %s27, 7
        %s304 = scalar_select %p303, %s27, 7
        %s305 = smul.addr %s304, 32
        %s306 = smul.addr %s305, 4
        %s307 = scalar_lea.vmem %s3, %s306
        %p308 = pneg %p138
        %p309 = pneg %p135
        %p310 = scmp.lt.s32.totalorder %s27, 7
        %s311 = scalar_select %p310, %s27, 7
        %s312 = smul.addr %s311, 8
        %s313 = smul.addr %s312, 4
        %s314 = scalar_lea.vmem %s4, %s313
        %p315 = pneg %p164
        %p316 = pneg %p161
        %p317 = pneg %p185
        %p318 = pneg %p182
        %p319 = pneg %p213
        %p320 = pneg %p210
        %s321 = sand.u32 %s200, 1
        %s322 = scalar_lea.sflag [#allocation4], %s321
        %s323 = sand.u32 %s200, 1
        %s324 = smul.addr %s323, 256
        %s325 = scalar_lea.vmem [#allocation3], %s324
        %p326 = scmp.lt.s32.totalorder %s25, 1
        %s327 = scalar_select %p326, %s25, 1
        %s328 = smul.addr %s327, 32
        %s329 = smul.addr %s328, 4
        %s330 = scalar_lea.vmem %s0, %s329
        %p331 = scmp.lt.s32.totalorder %s27, 7
        %s332 = scalar_select %p331, %s27, 7
        %s333 = smul.addr %s332, 32
        %s334 = smul.addr %s333, 4
        %s335 = scalar_lea.vmem %s1, %s334
        %p336 = scmp.lt.s32.totalorder %s27, 7
        %s337 = scalar_select %p336, %s27, 7
        %s338 = smul.addr %s337, 32
        %s339 = smul.addr %s338, 4
        %s340 = scalar_lea.vmem %s2, %s339
        %p341 = scmp.lt.s32.totalorder %s27, 7
        %s342 = scalar_select %p341, %s27, 7
        %s343 = smul.addr %s342, 32
        %s344 = smul.addr %s343, 4
        %s345 = scalar_lea.vmem %s3, %s344
        %p346 = scmp.lt.s32.totalorder %s27, 7
        %s347 = scalar_select %p346, %s27, 7
        %s348 = smul.addr %s347, 8
        %s349 = smul.addr %s348, 4
        %s350 = scalar_lea.vmem %s4, %s349
        %s351 = smul.u32 16, %s26
        %p353 = scmp.eq.s32.totalorder %s27, 0
        // Predicated region
        $region45: #{tpu_custom_call.1} parent=43 // pred_check
          %p354 = pneg %p353
        $region46: #{tpu_custom_call.1} parent=43 // pred_check_branch
          %356 = sbr.rel (%p354) target = $region48
        $region47: #{tpu_custom_call.1} parent=43 // pred_region
          %357 = vst [vmem:[#allocation2] sm:$0xff] 0.0
          %358 = vst [vmem:[#allocation2 + $0x8] sm:$0xff] 0.0
          %359 = vst [vmem:[#allocation2 + $0x10] sm:$0xff] 0.0
          %360 = vst [vmem:[#allocation2 + $0x18] sm:$0xff] 0.0
          %361 = vst [vmem:[#allocation2 + $0x20] sm:$0xff] 0.0
          %362 = vst [vmem:[#allocation2 + $0x28] sm:$0xff] 0.0
          %363 = vst [vmem:[#allocation2 + $0x30] sm:$0xff] 0.0
          %364 = vst [vmem:[#allocation2 + $0x38] sm:$0xff] 0.0
          %365 = vst [vmem:[#allocation2 + $0x40] sm:$0xff] 0.0
          %366 = vst [vmem:[#allocation2 + $0x48] sm:$0xff] 0.0
          %367 = vst [vmem:[#allocation2 + $0x50] sm:$0xff] 0.0
          %368 = vst [vmem:[#allocation2 + $0x58] sm:$0xff] 0.0
          %369 = vst [vmem:[#allocation2 + $0x60] sm:$0xff] 0.0
          %370 = vst [vmem:[#allocation2 + $0x68] sm:$0xff] 0.0
          %371 = vst [vmem:[#allocation2 + $0x70] sm:$0xff] 0.0
          %372 = vst [vmem:[#allocation2 + $0x78] sm:$0xff] 0.0
          %373 = vst [vmem:[#allocation2 + $0x80] sm:$0xff] 0.0
          %374 = vst [vmem:[#allocation2 + $0x88] sm:$0xff] 0.0
          %375 = vst [vmem:[#allocation2 + $0x90] sm:$0xff] 0.0
          %376 = vst [vmem:[#allocation2 + $0x98] sm:$0xff] 0.0
          %377 = vst [vmem:[#allocation2 + $0xa0] sm:$0xff] 0.0
          %378 = vst [vmem:[#allocation2 + $0xa8] sm:$0xff] 0.0
          %379 = vst [vmem:[#allocation2 + $0xb0] sm:$0xff] 0.0
          %380 = vst [vmem:[#allocation2 + $0xb8] sm:$0xff] 0.0
          %381 = vst [vmem:[#allocation2 + $0xc0] sm:$0xff] 0.0
          %382 = vst [vmem:[#allocation2 + $0xc8] sm:$0xff] 0.0
          %383 = vst [vmem:[#allocation2 + $0xd0] sm:$0xff] 0.0
          %384 = vst [vmem:[#allocation2 + $0xd8] sm:$0xff] 0.0
          %385 = vst [vmem:[#allocation2 + $0xe0] sm:$0xff] 0.0
          %386 = vst [vmem:[#allocation2 + $0xe8] sm:$0xff] 0.0
          %387 = vst [vmem:[#allocation2 + $0xf0] sm:$0xff] 0.0
          %388 = vst [vmem:[#allocation2 + $0xf8] sm:$0xff] 0.0
        $region48: #{tpu_custom_call.1} parent=43 // pred_fallthru
          _
        %v389 = vld [vmem:[%s330] sm:$0xff]
        %v390 = vld [vmem:[%s330 + $0x8] sm:$0xff]
        %v391 = vld [vmem:[%s330 + $0x10] sm:$0xff]
        %v392 = vld [vmem:[%s330 + $0x18] sm:$0xff]
        %v393 = vld [vmem:[%s330 + $0x20] sm:$0xff]
        %v394 = vld [vmem:[%s330 + $0x28] sm:$0xff]
        %v395 = vld [vmem:[%s330 + $0x30] sm:$0xff]
        %v396 = vld [vmem:[%s330 + $0x38] sm:$0xff]
        %v397 = vld [vmem:[%s330 + $0x40] sm:$0xff]
        %v398 = vld [vmem:[%s330 + $0x48] sm:$0xff]
        %v399 = vld [vmem:[%s330 + $0x50] sm:$0xff]
        %v400 = vld [vmem:[%s330 + $0x58] sm:$0xff]
        %v401 = vld [vmem:[%s330 + $0x60] sm:$0xff]
        %v402 = vld [vmem:[%s330 + $0x68] sm:$0xff]
        %v403 = vld [vmem:[%s330 + $0x70] sm:$0xff]
        %v404 = vld [vmem:[%s330 + $0x78] sm:$0xff]
        %s405 = smul.u32 %s26, 128
        %s406 = sshra.s32 %s405, 3
        %s407 = sand.u32 %s405, 7
        %s408 = smul.u32 %s406, 2
        %s409 = smul.addr %s408, 4
        %s410 = scalar_lea.vmem %s330, %s409
        %v411 = vld [vmem:[%s410] sm:$0xff]
        %v412 = vld [vmem:[%s410 + $0x8] sm:$0xff]
        %v413 = vld [vmem:[%s410 + $0x10] sm:$0xff]
        %v414 = vld [vmem:[%s410 + $0x18] sm:$0xff]
        %v415 = vld [vmem:[%s410 + $0x20] sm:$0xff]
        %v416 = vld [vmem:[%s410 + $0x28] sm:$0xff]
        %v417 = vld [vmem:[%s410 + $0x30] sm:$0xff]
        %v418 = vld [vmem:[%s410 + $0x38] sm:$0xff]
        %v419 = vld [vmem:[%s410 + $0x40] sm:$0xff]
        %v420 = vld [vmem:[%s410 + $0x48] sm:$0xff]
        %v421 = vld [vmem:[%s410 + $0x50] sm:$0xff]
        %v422 = vld [vmem:[%s410 + $0x58] sm:$0xff]
        %v423 = vld [vmem:[%s410 + $0x60] sm:$0xff]
        %v424 = vld [vmem:[%s410 + $0x68] sm:$0xff]
        %v425 = vld [vmem:[%s410 + $0x70] sm:$0xff]
        %v426 = vld [vmem:[%s410 + $0x78] sm:$0xff]
        %v427 = vld [vmem:[%s335] sm:$0xf]
        %v428 = vld [vmem:[%s335 + $0x4] sm:$0xf]
        %v429 = vld [vmem:[%s335 + $0x8] sm:$0xf]
        %v430 = vld [vmem:[%s335 + $0xc] sm:$0xf]
        %v431 = vld [vmem:[%s335 + $0x10] sm:$0xf]
        %v432 = vld [vmem:[%s335 + $0x14] sm:$0xf]
        %v433 = vld [vmem:[%s335 + $0x18] sm:$0xf]
        %v434 = vld [vmem:[%s335 + $0x1c] sm:$0xf]
        %v435 = vld [vmem:[%s335 + $0x20] sm:$0xf]
        %v436 = vld [vmem:[%s335 + $0x24] sm:$0xf]
        %v437 = vld [vmem:[%s335 + $0x28] sm:$0xf]
        %v438 = vld [vmem:[%s335 + $0x2c] sm:$0xf]
        %v439 = vld [vmem:[%s335 + $0x30] sm:$0xf]
        %v440 = vld [vmem:[%s335 + $0x34] sm:$0xf]
        %v441 = vld [vmem:[%s335 + $0x38] sm:$0xf]
        %v442 = vld [vmem:[%s335 + $0x3c] sm:$0xf]
        %v443 = vld [vmem:[%s335 + $0x40] sm:$0xf]
        %v444 = vld [vmem:[%s335 + $0x44] sm:$0xf]
        %v445 = vld [vmem:[%s335 + $0x48] sm:$0xf]
        %v446 = vld [vmem:[%s335 + $0x4c] sm:$0xf]
        %v447 = vld [vmem:[%s335 + $0x50] sm:$0xf]
        %v448 = vld [vmem:[%s335 + $0x54] sm:$0xf]
        %v449 = vld [vmem:[%s335 + $0x58] sm:$0xf]
        %v450 = vld [vmem:[%s335 + $0x5c] sm:$0xf]
        %v451 = vld [vmem:[%s335 + $0x60] sm:$0xf]
        %v452 = vld [vmem:[%s335 + $0x64] sm:$0xf]
        %v453 = vld [vmem:[%s335 + $0x68] sm:$0xf]
        %v454 = vld [vmem:[%s335 + $0x6c] sm:$0xf]
        %v455 = vld [vmem:[%s335 + $0x70] sm:$0xf]
        %v456 = vld [vmem:[%s335 + $0x74] sm:$0xf]
        %v457 = vld [vmem:[%s335 + $0x78] sm:$0xf]
        %v458 = vld [vmem:[%s335 + $0x7c] sm:$0xf]
        %v475 = vunpack.c.l.b16 %v411
        %v476 = vunpack.c.h.b16 %v411
        %v477 = vunpack.c.l.b16 %v412
        %v478 = vunpack.c.h.b16 %v412
        %v479 = vunpack.c.l.b16 %v413
        %v480 = vunpack.c.h.b16 %v413
        %v481 = vunpack.c.l.b16 %v414
        %v482 = vunpack.c.h.b16 %v414
        %v483 = vunpack.c.l.b16 %v415
        %v484 = vunpack.c.h.b16 %v415
        %v485 = vunpack.c.l.b16 %v416
        %v486 = vunpack.c.h.b16 %v416
        %v487 = vunpack.c.l.b16 %v417
        %v488 = vunpack.c.h.b16 %v417
        %v489 = vunpack.c.l.b16 %v418
        %v490 = vunpack.c.h.b16 %v418
        %v491 = vunpack.c.l.b16 %v419
        %v492 = vunpack.c.h.b16 %v419
        %v493 = vunpack.c.l.b16 %v420
        %v494 = vunpack.c.h.b16 %v420
        %v495 = vunpack.c.l.b16 %v421
        %v496 = vunpack.c.h.b16 %v421
        %v497 = vunpack.c.l.b16 %v422
        %v498 = vunpack.c.h.b16 %v422
        %v499 = vunpack.c.l.b16 %v423
        %v500 = vunpack.c.h.b16 %v423
        %v501 = vunpack.c.l.b16 %v424
        %v502 = vunpack.c.h.b16 %v424
        %v503 = vunpack.c.l.b16 %v425
        %v504 = vunpack.c.h.b16 %v425
        %v505 = vunpack.c.l.b16 %v426
        %v506 = vunpack.c.h.b16 %v426
        %v507 = vpack.c.b16 %v477, %v475
        %v508 = vpack.c.b16 %v478, %v476
        %v509 = vpack.c.b16 %v481, %v479
        %v510 = vpack.c.b16 %v482, %v480
        %v511 = vpack.c.b16 %v485, %v483
        %v512 = vpack.c.b16 %v486, %v484
        %v513 = vpack.c.b16 %v489, %v487
        %v514 = vpack.c.b16 %v490, %v488
        %v515 = vpack.c.b16 %v493, %v491
        %v516 = vpack.c.b16 %v494, %v492
        %v517 = vpack.c.b16 %v497, %v495
        %v518 = vpack.c.b16 %v498, %v496
        %v519 = vpack.c.b16 %v501, %v499
        %v520 = vpack.c.b16 %v502, %v500
        %v521 = vpack.c.b16 %v505, %v503
        %v522 = vpack.c.b16 %v506, %v504
        %v571 = vunpack.c.l.b16 %v427
        %v572 = vunpack.c.l.b16 %v428
        %v573 = vunpack.c.l.b16 %v429
        %v574 = vunpack.c.l.b16 %v430
        %v575 = vunpack.c.l.b16 %v431
        %v576 = vunpack.c.l.b16 %v432
        %v577 = vunpack.c.l.b16 %v433
        %v578 = vunpack.c.l.b16 %v434
        %v579 = vunpack.c.l.b16 %v435
        %v580 = vunpack.c.l.b16 %v436
        %v581 = vunpack.c.l.b16 %v437
        %v582 = vunpack.c.l.b16 %v438
        %v583 = vunpack.c.l.b16 %v439
        %v584 = vunpack.c.l.b16 %v440
        %v585 = vunpack.c.l.b16 %v441
        %v586 = vunpack.c.l.b16 %v442
        %v587 = vunpack.c.l.b16 %v443
        %v588 = vunpack.c.l.b16 %v444
        %v589 = vunpack.c.l.b16 %v445
        %v590 = vunpack.c.l.b16 %v446
        %v591 = vunpack.c.l.b16 %v447
        %v592 = vunpack.c.l.b16 %v448
        %v593 = vunpack.c.l.b16 %v449
        %v594 = vunpack.c.l.b16 %v450
        %v595 = vunpack.c.l.b16 %v451
        %v596 = vunpack.c.l.b16 %v452
        %v597 = vunpack.c.l.b16 %v453
        %v598 = vunpack.c.l.b16 %v454
        %v599 = vunpack.c.l.b16 %v455
        %v600 = vunpack.c.l.b16 %v456
        %v601 = vunpack.c.l.b16 %v457
        %v602 = vunpack.c.l.b16 %v458
        %v603 = vpack.c.b16 %v572, %v571
        %v604 = vpack.c.b16 %v574, %v573
        %v605 = vpack.c.b16 %v576, %v575
        %v606 = vpack.c.b16 %v578, %v577
        %v607 = vpack.c.b16 %v580, %v579
        %v608 = vpack.c.b16 %v582, %v581
        %v609 = vpack.c.b16 %v584, %v583
        %v610 = vpack.c.b16 %v586, %v585
        %v611 = vpack.c.b16 %v588, %v587
        %v612 = vpack.c.b16 %v590, %v589
        %v613 = vpack.c.b16 %v592, %v591
        %v614 = vpack.c.b16 %v594, %v593
        %v615 = vpack.c.b16 %v596, %v595
        %v616 = vpack.c.b16 %v598, %v597
        %v617 = vpack.c.b16 %v600, %v599
        %v618 = vpack.c.b16 %v602, %v601
        %635 = vmatpush.bf16.msra.mxu0 %v610
        %636 = vmatpush.bf16.msra.mxu0 %v609
        %637 = vmatpush.bf16.msra.mxu0 %v608
        %638 = vmatpush.bf16.msra.mxu0 %v607
        %639 = vmatpush.bf16.msra.mxu0 %v606
        %640 = vmatpush.bf16.msra.mxu0 %v605
        %641 = vmatpush.bf16.msra.mxu0 %v604
        %642 = vmatpush.bf16.msra.mxu0 %v603
        %643 = vmatmul.bf16.gmra.mxu0 %v507
        %v644 = vpop.f32.mrf.mxu0
        %v645 = vadd.f32 0.0, %v644
        %v646 = vpop.f32.mrf.mxu0
        %v647 = vadd.f32 0.0, %v646
        %648 = vmatmul.bf16.gmra.mxu0 %v509
        %v649 = vpop.f32.mrf.mxu0
        %v650 = vadd.f32 0.0, %v649
        %v651 = vpop.f32.mrf.mxu0
        %v652 = vadd.f32 0.0, %v651
        %653 = vmatmul.bf16.gmra.mxu0 %v511
        %v654 = vpop.f32.mrf.mxu0
        %v655 = vadd.f32 0.0, %v654
        %v656 = vpop.f32.mrf.mxu0
        %v657 = vadd.f32 0.0, %v656
        %658 = vmatmul.bf16.gmra.mxu0 %v513
        %v659 = vpop.f32.mrf.mxu0
        %v660 = vadd.f32 0.0, %v659
        %v661 = vpop.f32.mrf.mxu0
        %v662 = vadd.f32 0.0, %v661
        %663 = vmatmul.bf16.gmra.mxu0 %v515
        %v664 = vpop.f32.mrf.mxu0
        %v665 = vadd.f32 0.0, %v664
        %v666 = vpop.f32.mrf.mxu0
        %v667 = vadd.f32 0.0, %v666
        %668 = vmatmul.bf16.gmra.mxu0 %v517
        %v669 = vpop.f32.mrf.mxu0
        %v670 = vadd.f32 0.0, %v669
        %v671 = vpop.f32.mrf.mxu0
        %v672 = vadd.f32 0.0, %v671
        %673 = vmatmul.bf16.gmra.mxu0 %v519
        %v674 = vpop.f32.mrf.mxu0
        %v675 = vadd.f32 0.0, %v674
        %v676 = vpop.f32.mrf.mxu0
        %v677 = vadd.f32 0.0, %v676
        %678 = vmatmul.bf16.gmra.mxu0 %v521
        %v679 = vpop.f32.mrf.mxu0
        %v680 = vadd.f32 0.0, %v679
        %v681 = vpop.f32.mrf.mxu0
        %v682 = vadd.f32 0.0, %v681
        %683 = vdwg.mxu0
        %684 = vmatpush.bf16.msra.mxu0 %v618
        %685 = vmatpush.bf16.msra.mxu0 %v617
        %686 = vmatpush.bf16.msra.mxu0 %v616
        %687 = vmatpush.bf16.msra.mxu0 %v615
        %688 = vmatpush.bf16.msra.mxu0 %v614
        %689 = vmatpush.bf16.msra.mxu0 %v613
        %690 = vmatpush.bf16.msra.mxu0 %v612
        %691 = vmatpush.bf16.msra.mxu0 %v611
        %692 = vmatmul.bf16.gmra.mxu0 %v508
        %v693 = vpop.f32.mrf.mxu0
        %v694 = vadd.f32 %v645, %v693
        %v695 = vpop.f32.mrf.mxu0
        %v696 = vadd.f32 %v647, %v695
        %697 = vmatmul.bf16.gmra.mxu0 %v510
        %v698 = vpop.f32.mrf.mxu0
        %v699 = vadd.f32 %v650, %v698
        %v700 = vpop.f32.mrf.mxu0
        %v701 = vadd.f32 %v652, %v700
        %702 = vmatmul.bf16.gmra.mxu0 %v512
        %v703 = vpop.f32.mrf.mxu0
        %v704 = vadd.f32 %v655, %v703
        %v705 = vpop.f32.mrf.mxu0
        %v706 = vadd.f32 %v657, %v705
        %707 = vmatmul.bf16.gmra.mxu0 %v514
        %v708 = vpop.f32.mrf.mxu0
        %v709 = vadd.f32 %v660, %v708
        %v710 = vpop.f32.mrf.mxu0
        %v711 = vadd.f32 %v662, %v710
        %712 = vmatmul.bf16.gmra.mxu0 %v516
        %v713 = vpop.f32.mrf.mxu0
        %v714 = vadd.f32 %v665, %v713
        %v715 = vpop.f32.mrf.mxu0
        %v716 = vadd.f32 %v667, %v715
        %717 = vmatmul.bf16.gmra.mxu0 %v518
        %v718 = vpop.f32.mrf.mxu0
        %v719 = vadd.f32 %v670, %v718
        %v720 = vpop.f32.mrf.mxu0
        %v721 = vadd.f32 %v672, %v720
        %722 = vmatmul.bf16.gmra.mxu0 %v520
        %v723 = vpop.f32.mrf.mxu0
        %v724 = vadd.f32 %v675, %v723
        %v725 = vpop.f32.mrf.mxu0
        %v726 = vadd.f32 %v677, %v725
        %727 = vmatmul.bf16.gmra.mxu0 %v522
        %v728 = vpop.f32.mrf.mxu0
        %v729 = vadd.f32 %v680, %v728
        %v730 = vpop.f32.mrf.mxu0
        %v731 = vadd.f32 %v682, %v730
        %732 = vdwg.mxu0
        %v733 = vld [vmem:[%s340] sm:$0xf]
        %v734 = vld [vmem:[%s340 + $0x4] sm:$0xf]
        %v735 = vld [vmem:[%s340 + $0x8] sm:$0xf]
        %v736 = vld [vmem:[%s340 + $0xc] sm:$0xf]
        %v737 = vld [vmem:[%s340 + $0x10] sm:$0xf]
        %v738 = vld [vmem:[%s340 + $0x14] sm:$0xf]
        %v739 = vld [vmem:[%s340 + $0x18] sm:$0xf]
        %v740 = vld [vmem:[%s340 + $0x1c] sm:$0xf]
        %v741 = vld [vmem:[%s340 + $0x20] sm:$0xf]
        %v742 = vld [vmem:[%s340 + $0x24] sm:$0xf]
        %v743 = vld [vmem:[%s340 + $0x28] sm:$0xf]
        %v744 = vld [vmem:[%s340 + $0x2c] sm:$0xf]
        %v745 = vld [vmem:[%s340 + $0x30] sm:$0xf]
        %v746 = vld [vmem:[%s340 + $0x34] sm:$0xf]
        %v747 = vld [vmem:[%s340 + $0x38] sm:$0xf]
        %v748 = vld [vmem:[%s340 + $0x3c] sm:$0xf]
        %v749 = vld [vmem:[%s340 + $0x40] sm:$0xf]
        %v750 = vld [vmem:[%s340 + $0x44] sm:$0xf]
        %v751 = vld [vmem:[%s340 + $0x48] sm:$0xf]
        %v752 = vld [vmem:[%s340 + $0x4c] sm:$0xf]
        %v753 = vld [vmem:[%s340 + $0x50] sm:$0xf]
        %v754 = vld [vmem:[%s340 + $0x54] sm:$0xf]
        %v755 = vld [vmem:[%s340 + $0x58] sm:$0xf]
        %v756 = vld [vmem:[%s340 + $0x5c] sm:$0xf]
        %v757 = vld [vmem:[%s340 + $0x60] sm:$0xf]
        %v758 = vld [vmem:[%s340 + $0x64] sm:$0xf]
        %v759 = vld [vmem:[%s340 + $0x68] sm:$0xf]
        %v760 = vld [vmem:[%s340 + $0x6c] sm:$0xf]
        %v761 = vld [vmem:[%s340 + $0x70] sm:$0xf]
        %v762 = vld [vmem:[%s340 + $0x74] sm:$0xf]
        %v763 = vld [vmem:[%s340 + $0x78] sm:$0xf]
        %v764 = vld [vmem:[%s340 + $0x7c] sm:$0xf]
        %v781 = vunpack.c.l.b16 %v389
        %v782 = vunpack.c.h.b16 %v389
        %v783 = vunpack.c.l.b16 %v390
        %v784 = vunpack.c.h.b16 %v390
        %v785 = vunpack.c.l.b16 %v391
        %v786 = vunpack.c.h.b16 %v391
        %v787 = vunpack.c.l.b16 %v392
        %v788 = vunpack.c.h.b16 %v392
        %v789 = vunpack.c.l.b16 %v393
        %v790 = vunpack.c.h.b16 %v393
        %v791 = vunpack.c.l.b16 %v394
        %v792 = vunpack.c.h.b16 %v394
        %v793 = vunpack.c.l.b16 %v395
        %v794 = vunpack.c.h.b16 %v395
        %v795 = vunpack.c.l.b16 %v396
        %v796 = vunpack.c.h.b16 %v396
        %v797 = vunpack.c.l.b16 %v397
        %v798 = vunpack.c.h.b16 %v397
        %v799 = vunpack.c.l.b16 %v398
        %v800 = vunpack.c.h.b16 %v398
        %v801 = vunpack.c.l.b16 %v399
        %v802 = vunpack.c.h.b16 %v399
        %v803 = vunpack.c.l.b16 %v400
        %v804 = vunpack.c.h.b16 %v400
        %v805 = vunpack.c.l.b16 %v401
        %v806 = vunpack.c.h.b16 %v401
        %v807 = vunpack.c.l.b16 %v402
        %v808 = vunpack.c.h.b16 %v402
        %v809 = vunpack.c.l.b16 %v403
        %v810 = vunpack.c.h.b16 %v403
        %v811 = vunpack.c.l.b16 %v404
        %v812 = vunpack.c.h.b16 %v404
        %v813 = vpack.c.b16 %v783, %v781
        %v814 = vpack.c.b16 %v784, %v782
        %v815 = vpack.c.b16 %v787, %v785
        %v816 = vpack.c.b16 %v788, %v786
        %v817 = vpack.c.b16 %v791, %v789
        %v818 = vpack.c.b16 %v792, %v790
        %v819 = vpack.c.b16 %v795, %v793
        %v820 = vpack.c.b16 %v796, %v794
        %v821 = vpack.c.b16 %v799, %v797
        %v822 = vpack.c.b16 %v800, %v798
        %v823 = vpack.c.b16 %v803, %v801
        %v824 = vpack.c.b16 %v804, %v802
        %v825 = vpack.c.b16 %v807, %v805
        %v826 = vpack.c.b16 %v808, %v806
        %v827 = vpack.c.b16 %v811, %v809
        %v828 = vpack.c.b16 %v812, %v810
        %v877 = vunpack.c.l.b16 %v733
        %v878 = vunpack.c.l.b16 %v734
        %v879 = vunpack.c.l.b16 %v735
        %v880 = vunpack.c.l.b16 %v736
        %v881 = vunpack.c.l.b16 %v737
        %v882 = vunpack.c.l.b16 %v738
        %v883 = vunpack.c.l.b16 %v739
        %v884 = vunpack.c.l.b16 %v740
        %v885 = vunpack.c.l.b16 %v741
        %v886 = vunpack.c.l.b16 %v742
        %v887 = vunpack.c.l.b16 %v743
        %v888 = vunpack.c.l.b16 %v744
        %v889 = vunpack.c.l.b16 %v745
        %v890 = vunpack.c.l.b16 %v746
        %v891 = vunpack.c.l.b16 %v747
        %v892 = vunpack.c.l.b16 %v748
        %v893 = vunpack.c.l.b16 %v749
        %v894 = vunpack.c.l.b16 %v750
        %v895 = vunpack.c.l.b16 %v751
        %v896 = vunpack.c.l.b16 %v752
        %v897 = vunpack.c.l.b16 %v753
        %v898 = vunpack.c.l.b16 %v754
        %v899 = vunpack.c.l.b16 %v755
        %v900 = vunpack.c.l.b16 %v756
        %v901 = vunpack.c.l.b16 %v757
        %v902 = vunpack.c.l.b16 %v758
        %v903 = vunpack.c.l.b16 %v759
        %v904 = vunpack.c.l.b16 %v760
        %v905 = vunpack.c.l.b16 %v761
        %v906 = vunpack.c.l.b16 %v762
        %v907 = vunpack.c.l.b16 %v763
        %v908 = vunpack.c.l.b16 %v764
        %v909 = vpack.c.b16 %v878, %v877
        %v910 = vpack.c.b16 %v880, %v879
        %v911 = vpack.c.b16 %v882, %v881
        %v912 = vpack.c.b16 %v884, %v883
        %v913 = vpack.c.b16 %v886, %v885
        %v914 = vpack.c.b16 %v888, %v887
        %v915 = vpack.c.b16 %v890, %v889
        %v916 = vpack.c.b16 %v892, %v891
        %v917 = vpack.c.b16 %v894, %v893
        %v918 = vpack.c.b16 %v896, %v895
        %v919 = vpack.c.b16 %v898, %v897
        %v920 = vpack.c.b16 %v900, %v899
        %v921 = vpack.c.b16 %v902, %v901
        %v922 = vpack.c.b16 %v904, %v903
        %v923 = vpack.c.b16 %v906, %v905
        %v924 = vpack.c.b16 %v908, %v907
        %941 = vmatpush.bf16.msra.mxu0 %v916
        %942 = vmatpush.bf16.msra.mxu0 %v915
        %943 = vmatpush.bf16.msra.mxu0 %v914
        %944 = vmatpush.bf16.msra.mxu0 %v913
        %945 = vmatpush.bf16.msra.mxu0 %v912
        %946 = vmatpush.bf16.msra.mxu0 %v911
        %947 = vmatpush.bf16.msra.mxu0 %v910
        %948 = vmatpush.bf16.msra.mxu0 %v909
        %949 = vmatmul.bf16.gmra.mxu0 %v813
        %v950 = vpop.f32.mrf.mxu0
        %v951 = vadd.f32 0.0, %v950
        %v952 = vpop.f32.mrf.mxu0
        %v953 = vadd.f32 0.0, %v952
        %954 = vmatmul.bf16.gmra.mxu0 %v815
        %v955 = vpop.f32.mrf.mxu0
        %v956 = vadd.f32 0.0, %v955
        %v957 = vpop.f32.mrf.mxu0
        %v958 = vadd.f32 0.0, %v957
        %959 = vmatmul.bf16.gmra.mxu0 %v817
        %v960 = vpop.f32.mrf.mxu0
        %v961 = vadd.f32 0.0, %v960
        %v962 = vpop.f32.mrf.mxu0
        %v963 = vadd.f32 0.0, %v962
        %964 = vmatmul.bf16.gmra.mxu0 %v819
        %v965 = vpop.f32.mrf.mxu0
        %v966 = vadd.f32 0.0, %v965
        %v967 = vpop.f32.mrf.mxu0
        %v968 = vadd.f32 0.0, %v967
        %969 = vmatmul.bf16.gmra.mxu0 %v821
        %v970 = vpop.f32.mrf.mxu0
        %v971 = vadd.f32 0.0, %v970
        %v972 = vpop.f32.mrf.mxu0
        %v973 = vadd.f32 0.0, %v972
        %974 = vmatmul.bf16.gmra.mxu0 %v823
        %v975 = vpop.f32.mrf.mxu0
        %v976 = vadd.f32 0.0, %v975
        %v977 = vpop.f32.mrf.mxu0
        %v978 = vadd.f32 0.0, %v977
        %979 = vmatmul.bf16.gmra.mxu0 %v825
        %v980 = vpop.f32.mrf.mxu0
        %v981 = vadd.f32 0.0, %v980
        %v982 = vpop.f32.mrf.mxu0
        %v983 = vadd.f32 0.0, %v982
        %984 = vmatmul.bf16.gmra.mxu0 %v827
        %v985 = vpop.f32.mrf.mxu0
        %v986 = vadd.f32 0.0, %v985
        %v987 = vpop.f32.mrf.mxu0
        %v988 = vadd.f32 0.0, %v987
        %989 = vdwg.mxu0
        %990 = vmatpush.bf16.msra.mxu0 %v924
        %991 = vmatpush.bf16.msra.mxu0 %v923
        %992 = vmatpush.bf16.msra.mxu0 %v922
        %993 = vmatpush.bf16.msra.mxu0 %v921
        %994 = vmatpush.bf16.msra.mxu0 %v920
        %995 = vmatpush.bf16.msra.mxu0 %v919
        %996 = vmatpush.bf16.msra.mxu0 %v918
        %997 = vmatpush.bf16.msra.mxu0 %v917
        %998 = vmatmul.bf16.gmra.mxu0 %v814
        %v999 = vpop.f32.mrf.mxu0
        %v1000 = vadd.f32 %v951, %v999
        %v1001 = vpop.f32.mrf.mxu0
        %v1002 = vadd.f32 %v953, %v1001
        %1003 = vmatmul.bf16.gmra.mxu0 %v816
        %v1004 = vpop.f32.mrf.mxu0
        %v1005 = vadd.f32 %v956, %v1004
        %v1006 = vpop.f32.mrf.mxu0
        %v1007 = vadd.f32 %v958, %v1006
        %1008 = vmatmul.bf16.gmra.mxu0 %v818
        %v1009 = vpop.f32.mrf.mxu0
        %v1010 = vadd.f32 %v961, %v1009
        %v1011 = vpop.f32.mrf.mxu0
        %v1012 = vadd.f32 %v963, %v1011
        %1013 = vmatmul.bf16.gmra.mxu0 %v820
        %v1014 = vpop.f32.mrf.mxu0
        %v1015 = vadd.f32 %v966, %v1014
        %v1016 = vpop.f32.mrf.mxu0
        %v1017 = vadd.f32 %v968, %v1016
        %1018 = vmatmul.bf16.gmra.mxu0 %v822
        %v1019 = vpop.f32.mrf.mxu0
        %v1020 = vadd.f32 %v971, %v1019
        %v1021 = vpop.f32.mrf.mxu0
        %v1022 = vadd.f32 %v973, %v1021
        %1023 = vmatmul.bf16.gmra.mxu0 %v824
        %v1024 = vpop.f32.mrf.mxu0
        %v1025 = vadd.f32 %v976, %v1024
        %v1026 = vpop.f32.mrf.mxu0
        %v1027 = vadd.f32 %v978, %v1026
        %1028 = vmatmul.bf16.gmra.mxu0 %v826
        %v1029 = vpop.f32.mrf.mxu0
        %v1030 = vadd.f32 %v981, %v1029
        %v1031 = vpop.f32.mrf.mxu0
        %v1032 = vadd.f32 %v983, %v1031
        %1033 = vmatmul.bf16.gmra.mxu0 %v828
        %v1034 = vpop.f32.mrf.mxu0
        %v1035 = vadd.f32 %v986, %v1034
        %v1036 = vpop.f32.mrf.mxu0
        %v1037 = vadd.f32 %v988, %v1036
        %1038 = vdwg.mxu0
        %v1039 = vld [vmem:[%s345] sm:$0xf]
        %v1040 = vld [vmem:[%s345 + $0x4] sm:$0xf]
        %v1041 = vld [vmem:[%s345 + $0x8] sm:$0xf]
        %v1042 = vld [vmem:[%s345 + $0xc] sm:$0xf]
        %v1043 = vld [vmem:[%s345 + $0x10] sm:$0xf]
        %v1044 = vld [vmem:[%s345 + $0x14] sm:$0xf]
        %v1045 = vld [vmem:[%s345 + $0x18] sm:$0xf]
        %v1046 = vld [vmem:[%s345 + $0x1c] sm:$0xf]
        %v1047 = vld [vmem:[%s345 + $0x20] sm:$0xf]
        %v1048 = vld [vmem:[%s345 + $0x24] sm:$0xf]
        %v1049 = vld [vmem:[%s345 + $0x28] sm:$0xf]
        %v1050 = vld [vmem:[%s345 + $0x2c] sm:$0xf]
        %v1051 = vld [vmem:[%s345 + $0x30] sm:$0xf]
        %v1052 = vld [vmem:[%s345 + $0x34] sm:$0xf]
        %v1053 = vld [vmem:[%s345 + $0x38] sm:$0xf]
        %v1054 = vld [vmem:[%s345 + $0x3c] sm:$0xf]
        %v1055 = vld [vmem:[%s345 + $0x40] sm:$0xf]
        %v1056 = vld [vmem:[%s345 + $0x44] sm:$0xf]
        %v1057 = vld [vmem:[%s345 + $0x48] sm:$0xf]
        %v1058 = vld [vmem:[%s345 + $0x4c] sm:$0xf]
        %v1059 = vld [vmem:[%s345 + $0x50] sm:$0xf]
        %v1060 = vld [vmem:[%s345 + $0x54] sm:$0xf]
        %v1061 = vld [vmem:[%s345 + $0x58] sm:$0xf]
        %v1062 = vld [vmem:[%s345 + $0x5c] sm:$0xf]
        %v1063 = vld [vmem:[%s345 + $0x60] sm:$0xf]
        %v1064 = vld [vmem:[%s345 + $0x64] sm:$0xf]
        %v1065 = vld [vmem:[%s345 + $0x68] sm:$0xf]
        %v1066 = vld [vmem:[%s345 + $0x6c] sm:$0xf]
        %v1067 = vld [vmem:[%s345 + $0x70] sm:$0xf]
        %v1068 = vld [vmem:[%s345 + $0x74] sm:$0xf]
        %v1069 = vld [vmem:[%s345 + $0x78] sm:$0xf]
        %v1070 = vld [vmem:[%s345 + $0x7c] sm:$0xf]
        %v1103 = vunpack.c.l.b16 %v1039
        %v1104 = vunpack.c.l.b16 %v1040
        %v1105 = vunpack.c.l.b16 %v1041
        %v1106 = vunpack.c.l.b16 %v1042
        %v1107 = vunpack.c.l.b16 %v1043
        %v1108 = vunpack.c.l.b16 %v1044
        %v1109 = vunpack.c.l.b16 %v1045
        %v1110 = vunpack.c.l.b16 %v1046
        %v1111 = vunpack.c.l.b16 %v1047
        %v1112 = vunpack.c.l.b16 %v1048
        %v1113 = vunpack.c.l.b16 %v1049
        %v1114 = vunpack.c.l.b16 %v1050
        %v1115 = vunpack.c.l.b16 %v1051
        %v1116 = vunpack.c.l.b16 %v1052
        %v1117 = vunpack.c.l.b16 %v1053
        %v1118 = vunpack.c.l.b16 %v1054
        %v1119 = vunpack.c.l.b16 %v1055
        %v1120 = vunpack.c.l.b16 %v1056
        %v1121 = vunpack.c.l.b16 %v1057
        %v1122 = vunpack.c.l.b16 %v1058
        %v1123 = vunpack.c.l.b16 %v1059
        %v1124 = vunpack.c.l.b16 %v1060
        %v1125 = vunpack.c.l.b16 %v1061
        %v1126 = vunpack.c.l.b16 %v1062
        %v1127 = vunpack.c.l.b16 %v1063
        %v1128 = vunpack.c.l.b16 %v1064
        %v1129 = vunpack.c.l.b16 %v1065
        %v1130 = vunpack.c.l.b16 %v1066
        %v1131 = vunpack.c.l.b16 %v1067
        %v1132 = vunpack.c.l.b16 %v1068
        %v1133 = vunpack.c.l.b16 %v1069
        %v1134 = vunpack.c.l.b16 %v1070
        %v1135 = vpack.c.b16 %v1104, %v1103
        %v1136 = vpack.c.b16 %v1106, %v1105
        %v1137 = vpack.c.b16 %v1108, %v1107
        %v1138 = vpack.c.b16 %v1110, %v1109
        %v1139 = vpack.c.b16 %v1112, %v1111
        %v1140 = vpack.c.b16 %v1114, %v1113
        %v1141 = vpack.c.b16 %v1116, %v1115
        %v1142 = vpack.c.b16 %v1118, %v1117
        %v1143 = vpack.c.b16 %v1120, %v1119
        %v1144 = vpack.c.b16 %v1122, %v1121
        %v1145 = vpack.c.b16 %v1124, %v1123
        %v1146 = vpack.c.b16 %v1126, %v1125
        %v1147 = vpack.c.b16 %v1128, %v1127
        %v1148 = vpack.c.b16 %v1130, %v1129
        %v1149 = vpack.c.b16 %v1132, %v1131
        %v1150 = vpack.c.b16 %v1134, %v1133
        %1167 = vmatpush.bf16.msra.mxu0 %v1142
        %1168 = vmatpush.bf16.msra.mxu0 %v1141
        %1169 = vmatpush.bf16.msra.mxu0 %v1140
        %1170 = vmatpush.bf16.msra.mxu0 %v1139
        %1171 = vmatpush.bf16.msra.mxu0 %v1138
        %1172 = vmatpush.bf16.msra.mxu0 %v1137
        %1173 = vmatpush.bf16.msra.mxu0 %v1136
        %1174 = vmatpush.bf16.msra.mxu0 %v1135
        %1175 = vmatmul.bf16.gmra.mxu0 %v813
        %v1176 = vpop.f32.mrf.mxu0
        %v1177 = vadd.f32 0.0, %v1176
        %v1178 = vpop.f32.mrf.mxu0
        %v1179 = vadd.f32 0.0, %v1178
        %1180 = vmatmul.bf16.gmra.mxu0 %v815
        %v1181 = vpop.f32.mrf.mxu0
        %v1182 = vadd.f32 0.0, %v1181
        %v1183 = vpop.f32.mrf.mxu0
        %v1184 = vadd.f32 0.0, %v1183
        %1185 = vmatmul.bf16.gmra.mxu0 %v817
        %v1186 = vpop.f32.mrf.mxu0
        %v1187 = vadd.f32 0.0, %v1186
        %v1188 = vpop.f32.mrf.mxu0
        %v1189 = vadd.f32 0.0, %v1188
        %1190 = vmatmul.bf16.gmra.mxu0 %v819
        %v1191 = vpop.f32.mrf.mxu0
        %v1192 = vadd.f32 0.0, %v1191
        %v1193 = vpop.f32.mrf.mxu0
        %v1194 = vadd.f32 0.0, %v1193
        %1195 = vmatmul.bf16.gmra.mxu0 %v821
        %v1196 = vpop.f32.mrf.mxu0
        %v1197 = vadd.f32 0.0, %v1196
        %v1198 = vpop.f32.mrf.mxu0
        %v1199 = vadd.f32 0.0, %v1198
        %1200 = vmatmul.bf16.gmra.mxu0 %v823
        %v1201 = vpop.f32.mrf.mxu0
        %v1202 = vadd.f32 0.0, %v1201
        %v1203 = vpop.f32.mrf.mxu0
        %v1204 = vadd.f32 0.0, %v1203
        %1205 = vmatmul.bf16.gmra.mxu0 %v825
        %v1206 = vpop.f32.mrf.mxu0
        %v1207 = vadd.f32 0.0, %v1206
        %v1208 = vpop.f32.mrf.mxu0
        %v1209 = vadd.f32 0.0, %v1208
        %1210 = vmatmul.bf16.gmra.mxu0 %v827
        %v1211 = vpop.f32.mrf.mxu0
        %v1212 = vadd.f32 0.0, %v1211
        %v1213 = vpop.f32.mrf.mxu0
        %v1214 = vadd.f32 0.0, %v1213
        %1215 = vdwg.mxu0
        %1216 = vmatpush.bf16.msra.mxu0 %v1150
        %1217 = vmatpush.bf16.msra.mxu0 %v1149
        %1218 = vmatpush.bf16.msra.mxu0 %v1148
        %1219 = vmatpush.bf16.msra.mxu0 %v1147
        %1220 = vmatpush.bf16.msra.mxu0 %v1146
        %1221 = vmatpush.bf16.msra.mxu0 %v1145
        %1222 = vmatpush.bf16.msra.mxu0 %v1144
        %1223 = vmatpush.bf16.msra.mxu0 %v1143
        %1224 = vmatmul.bf16.gmra.mxu0 %v814
        %v1225 = vpop.f32.mrf.mxu0
        %v1226 = vadd.f32 %v1177, %v1225
        %v1227 = vpop.f32.mrf.mxu0
        %v1228 = vadd.f32 %v1179, %v1227
        %1229 = vmatmul.bf16.gmra.mxu0 %v816
        %v1230 = vpop.f32.mrf.mxu0
        %v1231 = vadd.f32 %v1182, %v1230
        %v1232 = vpop.f32.mrf.mxu0
        %v1233 = vadd.f32 %v1184, %v1232
        %1234 = vmatmul.bf16.gmra.mxu0 %v818
        %v1235 = vpop.f32.mrf.mxu0
        %v1236 = vadd.f32 %v1187, %v1235
        %v1237 = vpop.f32.mrf.mxu0
        %v1238 = vadd.f32 %v1189, %v1237
        %1239 = vmatmul.bf16.gmra.mxu0 %v820
        %v1240 = vpop.f32.mrf.mxu0
        %v1241 = vadd.f32 %v1192, %v1240
        %v1242 = vpop.f32.mrf.mxu0
        %v1243 = vadd.f32 %v1194, %v1242
        %1244 = vmatmul.bf16.gmra.mxu0 %v822
        %v1245 = vpop.f32.mrf.mxu0
        %v1246 = vadd.f32 %v1197, %v1245
        %v1247 = vpop.f32.mrf.mxu0
        %v1248 = vadd.f32 %v1199, %v1247
        %1249 = vmatmul.bf16.gmra.mxu0 %v824
        %v1250 = vpop.f32.mrf.mxu0
        %v1251 = vadd.f32 %v1202, %v1250
        %v1252 = vpop.f32.mrf.mxu0
        %v1253 = vadd.f32 %v1204, %v1252
        %1254 = vmatmul.bf16.gmra.mxu0 %v826
        %v1255 = vpop.f32.mrf.mxu0
        %v1256 = vadd.f32 %v1207, %v1255
        %v1257 = vpop.f32.mrf.mxu0
        %v1258 = vadd.f32 %v1209, %v1257
        %1259 = vmatmul.bf16.gmra.mxu0 %v828
        %v1260 = vpop.f32.mrf.mxu0
        %v1261 = vadd.f32 %v1212, %v1260
        %v1262 = vpop.f32.mrf.mxu0
        %v1263 = vadd.f32 %v1214, %v1262
        %1264 = vdwg.mxu0
        %v1265 = vpack.c.bf16 %v696, %v694
        %v1266 = vpack.c.bf16 %v701, %v699
        %v1267 = vpack.c.bf16 %v706, %v704
        %v1268 = vpack.c.bf16 %v711, %v709
        %v1269 = vpack.c.bf16 %v716, %v714
        %v1270 = vpack.c.bf16 %v721, %v719
        %v1271 = vpack.c.bf16 %v726, %v724
        %v1272 = vpack.c.bf16 %v731, %v729
        %v1273 = vpack.c.bf16 %v1002, %v1000
        %v1274 = vpack.c.bf16 %v1007, %v1005
        %v1275 = vpack.c.bf16 %v1012, %v1010
        %v1276 = vpack.c.bf16 %v1017, %v1015
        %v1277 = vpack.c.bf16 %v1022, %v1020
        %v1278 = vpack.c.bf16 %v1027, %v1025
        %v1279 = vpack.c.bf16 %v1032, %v1030
        %v1280 = vpack.c.bf16 %v1037, %v1035
        %vm1281 = vcmask 261120
        %v1283 = vsel %vm1281, %v1265, 0
        %v1286 = vsel %vm1281, %v1266, 0
        %v1289 = vsel %vm1281, %v1267, 0
        %v1292 = vsel %vm1281, %v1268, 0
        %v1295 = vsel %vm1281, %v1269, 0
        %v1298 = vsel %vm1281, %v1270, 0
        %v1301 = vsel %vm1281, %v1271, 0
        %v1304 = vsel %vm1281, %v1272, 0
        %v1307 = vsel %vm1281, %v1273, 0
        %v1310 = vsel %vm1281, %v1274, 0
        %v1313 = vsel %vm1281, %v1275, 0
        %v1316 = vsel %vm1281, %v1276, 0
        %v1319 = vsel %vm1281, %v1277, 0
        %v1322 = vsel %vm1281, %v1278, 0
        %v1325 = vsel %vm1281, %v1279, 0
        %v1328 = vsel %vm1281, %v1280, 0
        %1330 = vmatpush.bf16.xpose.msra.mxu0 %v1328
        %1331 = vmatpush.bf16.xpose.msra.mxu0 %v1325
        %1332 = vmatpush.bf16.xpose.msra.mxu0 %v1322
        %1333 = vmatpush.bf16.xpose.msra.mxu0 %v1319
        %1334 = vmatpush.bf16.xpose.msra.mxu0 %v1316
        %1335 = vmatpush.bf16.xpose.msra.mxu0 %v1313
        %1336 = vmatpush.bf16.xpose.msra.mxu0 %v1310
        %1337 = vmatpush.bf16.xpose.msra.mxu0 %v1307
        %1338 = vmatmul.bf16.gmra.mxu0 %v1283
        %v1339 = vpop.f32.mrf.mxu0
        %v1340 = vadd.f32 0.0, %v1339
        %v1341 = vpop.f32.mrf.mxu0
        %v1342 = vadd.f32 0.0, %v1341
        %1343 = vmatmul.bf16.gmra.mxu0 %v1286
        %v1344 = vpop.f32.mrf.mxu0
        %v1345 = vadd.f32 0.0, %v1344
        %v1346 = vpop.f32.mrf.mxu0
        %v1347 = vadd.f32 0.0, %v1346
        %1348 = vmatmul.bf16.gmra.mxu0 %v1289
        %v1349 = vpop.f32.mrf.mxu0
        %v1350 = vadd.f32 0.0, %v1349
        %v1351 = vpop.f32.mrf.mxu0
        %v1352 = vadd.f32 0.0, %v1351
        %1353 = vmatmul.bf16.gmra.mxu0 %v1292
        %v1354 = vpop.f32.mrf.mxu0
        %v1355 = vadd.f32 0.0, %v1354
        %v1356 = vpop.f32.mrf.mxu0
        %v1357 = vadd.f32 0.0, %v1356
        %1358 = vmatmul.bf16.gmra.mxu0 %v1295
        %v1359 = vpop.f32.mrf.mxu0
        %v1360 = vadd.f32 0.0, %v1359
        %v1361 = vpop.f32.mrf.mxu0
        %v1362 = vadd.f32 0.0, %v1361
        %1363 = vmatmul.bf16.gmra.mxu0 %v1298
        %v1364 = vpop.f32.mrf.mxu0
        %v1365 = vadd.f32 0.0, %v1364
        %v1366 = vpop.f32.mrf.mxu0
        %v1367 = vadd.f32 0.0, %v1366
        %1368 = vmatmul.bf16.gmra.mxu0 %v1301
        %v1369 = vpop.f32.mrf.mxu0
        %v1370 = vadd.f32 0.0, %v1369
        %v1371 = vpop.f32.mrf.mxu0
        %v1372 = vadd.f32 0.0, %v1371
        %1373 = vmatmul.bf16.gmra.mxu0 %v1304
        %v1374 = vpop.f32.mrf.mxu0
        %v1375 = vadd.f32 0.0, %v1374
        %v1376 = vpop.f32.mrf.mxu0
        %v1377 = vadd.f32 0.0, %v1376
        %1378 = vdwg.mxu0
        %1379 = vmax.xlane.f32.xlu0 %v1340
        %v1380 = vpop.xlane.xlu0 %1379
        %1381 = vmax.xlane.f32.xlu0 %v1342
        %v1382 = vpop.xlane.xlu0 %1381
        %1383 = vmax.xlane.f32.xlu0 %v1345
        %v1384 = vpop.xlane.xlu0 %1383
        %1385 = vmax.xlane.f32.xlu0 %v1347
        %v1386 = vpop.xlane.xlu0 %1385
        %1387 = vmax.xlane.f32.xlu0 %v1350
        %v1388 = vpop.xlane.xlu0 %1387
        %1389 = vmax.xlane.f32.xlu0 %v1352
        %v1390 = vpop.xlane.xlu0 %1389
        %1391 = vmax.xlane.f32.xlu0 %v1355
        %v1392 = vpop.xlane.xlu0 %1391
        %1393 = vmax.xlane.f32.xlu0 %v1357
        %v1394 = vpop.xlane.xlu0 %1393
        %1395 = vmax.xlane.f32.xlu0 %v1360
        %v1396 = vpop.xlane.xlu0 %1395
        %1397 = vmax.xlane.f32.xlu0 %v1362
        %v1398 = vpop.xlane.xlu0 %1397
        %1399 = vmax.xlane.f32.xlu0 %v1365
        %v1400 = vpop.xlane.xlu0 %1399
        %1401 = vmax.xlane.f32.xlu0 %v1367
        %v1402 = vpop.xlane.xlu0 %1401
        %1403 = vmax.xlane.f32.xlu0 %v1370
        %v1404 = vpop.xlane.xlu0 %1403
        %1405 = vmax.xlane.f32.xlu0 %v1372
        %v1406 = vpop.xlane.xlu0 %1405
        %1407 = vmax.xlane.f32.xlu0 %v1375
        %v1408 = vpop.xlane.xlu0 %1407
        %1409 = vmax.xlane.f32.xlu0 %v1377
        %v1410 = vpop.xlane.xlu0 %1409
        %v1411 = vsub.f32 %v1340, %v1380
        %v1412 = vsub.f32 %v1342, %v1382
        %v1413 = vsub.f32 %v1345, %v1384
        %v1414 = vsub.f32 %v1347, %v1386
        %v1415 = vsub.f32 %v1350, %v1388
        %v1416 = vsub.f32 %v1352, %v1390
        %v1417 = vsub.f32 %v1355, %v1392
        %v1418 = vsub.f32 %v1357, %v1394
        %v1419 = vsub.f32 %v1360, %v1396
        %v1420 = vsub.f32 %v1362, %v1398
        %v1421 = vsub.f32 %v1365, %v1400
        %v1422 = vsub.f32 %v1367, %v1402
        %v1423 = vsub.f32 %v1370, %v1404
        %v1424 = vsub.f32 %v1372, %v1406
        %v1425 = vsub.f32 %v1375, %v1408
        %v1426 = vsub.f32 %v1377, %v1410
        %v1427 = vmul.f32 %v1411, 1.442695
        %v1428 = vpow.pop %v1427
        %v1429 = vmul.f32 %v1412, 1.442695
        %v1430 = vpow.pop %v1429
        %v1431 = vmul.f32 %v1413, 1.442695
        %v1432 = vpow.pop %v1431
        %v1433 = vmul.f32 %v1414, 1.442695
        %v1434 = vpow.pop %v1433
        %v1435 = vmul.f32 %v1415, 1.442695
        %v1436 = vpow.pop %v1435
        %v1437 = vmul.f32 %v1416, 1.442695
        %v1438 = vpow.pop %v1437
        %v1439 = vmul.f32 %v1417, 1.442695
        %v1440 = vpow.pop %v1439
        %v1441 = vmul.f32 %v1418, 1.442695
        %v1442 = vpow.pop %v1441
        %v1443 = vmul.f32 %v1419, 1.442695
        %v1444 = vpow.pop %v1443
        %v1445 = vmul.f32 %v1420, 1.442695
        %v1446 = vpow.pop %v1445
        %v1447 = vmul.f32 %v1421, 1.442695
        %v1448 = vpow.pop %v1447
        %v1449 = vmul.f32 %v1422, 1.442695
        %v1450 = vpow.pop %v1449
        %v1451 = vmul.f32 %v1423, 1.442695
        %v1452 = vpow.pop %v1451
        %v1453 = vmul.f32 %v1424, 1.442695
        %v1454 = vpow.pop %v1453
        %v1455 = vmul.f32 %v1425, 1.442695
        %v1456 = vpow.pop %v1455
        %v1457 = vmul.f32 %v1426, 1.442695
        %v1458 = vpow.pop %v1457
        %1459 = vadd.xlane.f32.xlu0 %v1428
        %v1460 = vpop.xlane.xlu0 %1459
        %1461 = vadd.xlane.f32.xlu0 %v1430
        %v1462 = vpop.xlane.xlu0 %1461
        %1463 = vadd.xlane.f32.xlu0 %v1432
        %v1464 = vpop.xlane.xlu0 %1463
        %1465 = vadd.xlane.f32.xlu0 %v1434
        %v1466 = vpop.xlane.xlu0 %1465
        %1467 = vadd.xlane.f32.xlu0 %v1436
        %v1468 = vpop.xlane.xlu0 %1467
        %1469 = vadd.xlane.f32.xlu0 %v1438
        %v1470 = vpop.xlane.xlu0 %1469
        %1471 = vadd.xlane.f32.xlu0 %v1440
        %v1472 = vpop.xlane.xlu0 %1471
        %1473 = vadd.xlane.f32.xlu0 %v1442
        %v1474 = vpop.xlane.xlu0 %1473
        %1475 = vadd.xlane.f32.xlu0 %v1444
        %v1476 = vpop.xlane.xlu0 %1475
        %1477 = vadd.xlane.f32.xlu0 %v1446
        %v1478 = vpop.xlane.xlu0 %1477
        %1479 = vadd.xlane.f32.xlu0 %v1448
        %v1480 = vpop.xlane.xlu0 %1479
        %1481 = vadd.xlane.f32.xlu0 %v1450
        %v1482 = vpop.xlane.xlu0 %1481
        %1483 = vadd.xlane.f32.xlu0 %v1452
        %v1484 = vpop.xlane.xlu0 %1483
        %1485 = vadd.xlane.f32.xlu0 %v1454
        %v1486 = vpop.xlane.xlu0 %1485
        %1487 = vadd.xlane.f32.xlu0 %v1456
        %v1488 = vpop.xlane.xlu0 %1487
        %1489 = vadd.xlane.f32.xlu0 %v1458
        %v1490 = vpop.xlane.xlu0 %1489
        %v1491 = vrcp.pop %v1460
        %v1492 = vrcp.pop %v1462
        %v1493 = vrcp.pop %v1464
        %v1494 = vrcp.pop %v1466
        %v1495 = vrcp.pop %v1468
        %v1496 = vrcp.pop %v1470
        %v1497 = vrcp.pop %v1472
        %v1498 = vrcp.pop %v1474
        %v1499 = vrcp.pop %v1476
        %v1500 = vrcp.pop %v1478
        %v1501 = vrcp.pop %v1480
        %v1502 = vrcp.pop %v1482
        %v1503 = vrcp.pop %v1484
        %v1504 = vrcp.pop %v1486
        %v1505 = vrcp.pop %v1488
        %v1506 = vrcp.pop %v1490
        %v1507 = vmul.f32 %v1428, %v1491
        %v1508 = vmul.f32 %v1430, %v1492
        %v1509 = vmul.f32 %v1432, %v1493
        %v1510 = vmul.f32 %v1434, %v1494
        %v1511 = vmul.f32 %v1436, %v1495
        %v1512 = vmul.f32 %v1438, %v1496
        %v1513 = vmul.f32 %v1440, %v1497
        %v1514 = vmul.f32 %v1442, %v1498
        %v1515 = vmul.f32 %v1444, %v1499
        %v1516 = vmul.f32 %v1446, %v1500
        %v1517 = vmul.f32 %v1448, %v1501
        %v1518 = vmul.f32 %v1450, %v1502
        %v1519 = vmul.f32 %v1452, %v1503
        %v1520 = vmul.f32 %v1454, %v1504
        %v1521 = vmul.f32 %v1456, %v1505
        %v1522 = vmul.f32 %v1458, %v1506
        %v1523 = vpack.c.bf16 %v1508, %v1507
        %v1524 = vpack.c.bf16 %v1510, %v1509
        %v1525 = vpack.c.bf16 %v1512, %v1511
        %v1526 = vpack.c.bf16 %v1514, %v1513
        %v1527 = vpack.c.bf16 %v1516, %v1515
        %v1528 = vpack.c.bf16 %v1518, %v1517
        %v1529 = vpack.c.bf16 %v1520, %v1519
        %v1530 = vpack.c.bf16 %v1522, %v1521
        %v1531 = vpack.c.bf16 %v1228, %v1226
        %v1532 = vpack.c.bf16 %v1233, %v1231
        %v1533 = vpack.c.bf16 %v1238, %v1236
        %v1534 = vpack.c.bf16 %v1243, %v1241
        %v1535 = vpack.c.bf16 %v1248, %v1246
        %v1536 = vpack.c.bf16 %v1253, %v1251
        %v1537 = vpack.c.bf16 %v1258, %v1256
        %v1538 = vpack.c.bf16 %v1263, %v1261
        %1539 = vmatpush.bf16.msra.mxu0 %v1538
        %1540 = vmatpush.bf16.msra.mxu0 %v1537
        %1541 = vmatpush.bf16.msra.mxu0 %v1536
        %1542 = vmatpush.bf16.msra.mxu0 %v1535
        %1543 = vmatpush.bf16.msra.mxu0 %v1534
        %1544 = vmatpush.bf16.msra.mxu0 %v1533
        %1545 = vmatpush.bf16.msra.mxu0 %v1532
        %1546 = vmatpush.bf16.msra.mxu0 %v1531
        %1547 = vmatmul.bf16.gmra.mxu0 %v1523
        %v1548 = vpop.f32.mrf.mxu0
        %v1549 = vadd.f32 0.0, %v1548
        %v1550 = vpop.f32.mrf.mxu0
        %v1551 = vadd.f32 0.0, %v1550
        %1552 = vmatmul.bf16.gmra.mxu0 %v1524
        %v1553 = vpop.f32.mrf.mxu0
        %v1554 = vadd.f32 0.0, %v1553
        %v1555 = vpop.f32.mrf.mxu0
        %v1556 = vadd.f32 0.0, %v1555
        %1557 = vmatmul.bf16.gmra.mxu0 %v1525
        %v1558 = vpop.f32.mrf.mxu0
        %v1559 = vadd.f32 0.0, %v1558
        %v1560 = vpop.f32.mrf.mxu0
        %v1561 = vadd.f32 0.0, %v1560
        %1562 = vmatmul.bf16.gmra.mxu0 %v1526
        %v1563 = vpop.f32.mrf.mxu0
        %v1564 = vadd.f32 0.0, %v1563
        %v1565 = vpop.f32.mrf.mxu0
        %v1566 = vadd.f32 0.0, %v1565
        %1567 = vmatmul.bf16.gmra.mxu0 %v1527
        %v1568 = vpop.f32.mrf.mxu0
        %v1569 = vadd.f32 0.0, %v1568
        %v1570 = vpop.f32.mrf.mxu0
        %v1571 = vadd.f32 0.0, %v1570
        %1572 = vmatmul.bf16.gmra.mxu0 %v1528
        %v1573 = vpop.f32.mrf.mxu0
        %v1574 = vadd.f32 0.0, %v1573
        %v1575 = vpop.f32.mrf.mxu0
        %v1576 = vadd.f32 0.0, %v1575
        %1577 = vmatmul.bf16.gmra.mxu0 %v1529
        %v1578 = vpop.f32.mrf.mxu0
        %v1579 = vadd.f32 0.0, %v1578
        %v1580 = vpop.f32.mrf.mxu0
        %v1581 = vadd.f32 0.0, %v1580
        %1582 = vmatmul.bf16.gmra.mxu0 %v1530
        %v1583 = vpop.f32.mrf.mxu0
        %v1584 = vadd.f32 0.0, %v1583
        %v1585 = vpop.f32.mrf.mxu0
        %v1586 = vadd.f32 0.0, %v1585
        %1587 = vdwg.mxu0
        %v1588 = vld [vmem:[#allocation2] sm:$0xff]
        %v1589 = vld [vmem:[#allocation2 + $0x8] sm:$0xff]
        %v1590 = vld [vmem:[#allocation2 + $0x10] sm:$0xff]
        %v1591 = vld [vmem:[#allocation2 + $0x18] sm:$0xff]
        %v1592 = vld [vmem:[#allocation2 + $0x20] sm:$0xff]
        %v1593 = vld [vmem:[#allocation2 + $0x28] sm:$0xff]
        %v1594 = vld [vmem:[#allocation2 + $0x30] sm:$0xff]
        %v1595 = vld [vmem:[#allocation2 + $0x38] sm:$0xff]
        %v1596 = vld [vmem:[#allocation2 + $0x40] sm:$0xff]
        %v1597 = vld [vmem:[#allocation2 + $0x48] sm:$0xff]
        %v1598 = vld [vmem:[#allocation2 + $0x50] sm:$0xff]
        %v1599 = vld [vmem:[#allocation2 + $0x58] sm:$0xff]
        %v1600 = vld [vmem:[#allocation2 + $0x60] sm:$0xff]
        %v1601 = vld [vmem:[#allocation2 + $0x68] sm:$0xff]
        %v1602 = vld [vmem:[#allocation2 + $0x70] sm:$0xff]
        %v1603 = vld [vmem:[#allocation2 + $0x78] sm:$0xff]
        %v1604 = vld [vmem:[#allocation2 + $0x80] sm:$0xff]
        %v1605 = vld [vmem:[#allocation2 + $0x88] sm:$0xff]
        %v1606 = vld [vmem:[#allocation2 + $0x90] sm:$0xff]
        %v1607 = vld [vmem:[#allocation2 + $0x98] sm:$0xff]
        %v1608 = vld [vmem:[#allocation2 + $0xa0] sm:$0xff]
        %v1609 = vld [vmem:[#allocation2 + $0xa8] sm:$0xff]
        %v1610 = vld [vmem:[#allocation2 + $0xb0] sm:$0xff]
        %v1611 = vld [vmem:[#allocation2 + $0xb8] sm:$0xff]
        %v1612 = vld [vmem:[#allocation2 + $0xc0] sm:$0xff]
        %v1613 = vld [vmem:[#allocation2 + $0xc8] sm:$0xff]
        %v1614 = vld [vmem:[#allocation2 + $0xd0] sm:$0xff]
        %v1615 = vld [vmem:[#allocation2 + $0xd8] sm:$0xff]
        %v1616 = vld [vmem:[#allocation2 + $0xe0] sm:$0xff]
        %v1617 = vld [vmem:[#allocation2 + $0xe8] sm:$0xff]
        %v1618 = vld [vmem:[#allocation2 + $0xf0] sm:$0xff]
        %v1619 = vld [vmem:[#allocation2 + $0xf8] sm:$0xff]
        %v1620 = vpack.c.bf16 %v1551, %v1549
        %v1621 = vpack.c.bf16 %v1556, %v1554
        %v1622 = vpack.c.bf16 %v1561, %v1559
        %v1623 = vpack.c.bf16 %v1566, %v1564
        %v1624 = vpack.c.bf16 %v1571, %v1569
        %v1625 = vpack.c.bf16 %v1576, %v1574
        %v1626 = vpack.c.bf16 %v1581, %v1579
        %v1627 = vpack.c.bf16 %v1586, %v1584
        %v1628 = vld [vmem:[%s350] sm:$0xff]
        %v1629 = vld [vmem:[%s350 + $0x8] sm:$0xff]
        %v1630 = vld [vmem:[%s350 + $0x10] sm:$0xff]
        %v1631 = vld [vmem:[%s350 + $0x18] sm:$0xff]
        %v1636 = vunpack.c.l.b16 %v1628
        %v1637 = vunpack.c.h.b16 %v1628
        %v1638 = vunpack.c.l.b16 %v1629
        %v1639 = vunpack.c.h.b16 %v1629
        %v1640 = vunpack.c.l.b16 %v1630
        %v1641 = vunpack.c.h.b16 %v1630
        %v1642 = vunpack.c.l.b16 %v1631
        %v1643 = vunpack.c.h.b16 %v1631
        %v1644 = vpack.c.b16 %v1638, %v1636
        %v1645 = vpack.c.b16 %v1639, %v1637
        %v1646 = vpack.c.b16 %v1642, %v1640
        %v1647 = vpack.c.b16 %v1643, %v1641
        %v1653 = vsel %vm1281, %v1620, 0
        %v1656 = vsel %vm1281, %v1621, 0
        %v1659 = vsel %vm1281, %v1622, 0
        %v1662 = vsel %vm1281, %v1623, 0
        %v1665 = vsel %vm1281, %v1624, 0
        %v1668 = vsel %vm1281, %v1625, 0
        %v1671 = vsel %vm1281, %v1626, 0
        %v1674 = vsel %vm1281, %v1627, 0
        %1676 = vmatpush.bf16.msra.mxu0 0
        %1677 = vmatpush.bf16.msra.mxu0 0
        %1678 = vmatpush.bf16.msra.mxu0 0
        %1679 = vmatpush.bf16.msra.mxu0 0
        %1680 = vmatpush.bf16.msra.mxu0 0
        %1681 = vmatpush.bf16.msra.mxu0 0
        %1682 = vmatpush.bf16.msra.mxu0 %v1646
        %1683 = vmatpush.bf16.msra.mxu0 %v1644
        %1684 = vmatmul.bf16.gmra.mxu0 %v1653
        %v1685 = vpop.f32.mrf.mxu0
        %v1686 = vadd.f32 0.0, %v1685
        %v1687 = vpop.f32.mrf.mxu0
        %v1688 = vadd.f32 0.0, %v1687
        %1689 = vmatmul.bf16.gmra.mxu0 %v1656
        %v1690 = vpop.f32.mrf.mxu0
        %v1691 = vadd.f32 0.0, %v1690
        %v1692 = vpop.f32.mrf.mxu0
        %v1693 = vadd.f32 0.0, %v1692
        %1694 = vmatmul.bf16.gmra.mxu0 %v1659
        %v1695 = vpop.f32.mrf.mxu0
        %v1696 = vadd.f32 0.0, %v1695
        %v1697 = vpop.f32.mrf.mxu0
        %v1698 = vadd.f32 0.0, %v1697
        %1699 = vmatmul.bf16.gmra.mxu0 %v1662
        %v1700 = vpop.f32.mrf.mxu0
        %v1701 = vadd.f32 0.0, %v1700
        %v1702 = vpop.f32.mrf.mxu0
        %v1703 = vadd.f32 0.0, %v1702
        %1704 = vmatmul.bf16.gmra.mxu0 %v1665
        %v1705 = vpop.f32.mrf.mxu0
        %v1706 = vadd.f32 0.0, %v1705
        %v1707 = vpop.f32.mrf.mxu0
        %v1708 = vadd.f32 0.0, %v1707
        %1709 = vmatmul.bf16.gmra.mxu0 %v1668
        %v1710 = vpop.f32.mrf.mxu0
        %v1711 = vadd.f32 0.0, %v1710
        %v1712 = vpop.f32.mrf.mxu0
        %v1713 = vadd.f32 0.0, %v1712
        %1714 = vmatmul.bf16.gmra.mxu0 %v1671
        %v1715 = vpop.f32.mrf.mxu0
        %v1716 = vadd.f32 0.0, %v1715
        %v1717 = vpop.f32.mrf.mxu0
        %v1718 = vadd.f32 0.0, %v1717
        %1719 = vmatmul.bf16.gmra.mxu0 %v1674
        %v1720 = vpop.f32.mrf.mxu0
        %v1721 = vadd.f32 0.0, %v1720
        %v1722 = vpop.f32.mrf.mxu0
        %v1723 = vadd.f32 0.0, %v1722
        %1724 = vdwg.mxu0
        %1725 = vmatpush.bf16.msra.mxu0 0
        %1726 = vmatpush.bf16.msra.mxu0 0
        %1727 = vmatpush.bf16.msra.mxu0 0
        %1728 = vmatpush.bf16.msra.mxu0 0
        %1729 = vmatpush.bf16.msra.mxu0 0
        %1730 = vmatpush.bf16.msra.mxu0 0
        %1731 = vmatpush.bf16.msra.mxu0 %v1647
        %1732 = vmatpush.bf16.msra.mxu0 %v1645
        %1733 = vmatmul.bf16.gmra.mxu0 %v1653
        %v1734 = vpop.f32.mrf.mxu0
        %v1735 = vadd.f32 0.0, %v1734
        %v1736 = vpop.f32.mrf.mxu0
        %v1737 = vadd.f32 0.0, %v1736
        %1738 = vmatmul.bf16.gmra.mxu0 %v1656
        %v1739 = vpop.f32.mrf.mxu0
        %v1740 = vadd.f32 0.0, %v1739
        %v1741 = vpop.f32.mrf.mxu0
        %v1742 = vadd.f32 0.0, %v1741
        %1743 = vmatmul.bf16.gmra.mxu0 %v1659
        %v1744 = vpop.f32.mrf.mxu0
        %v1745 = vadd.f32 0.0, %v1744
        %v1746 = vpop.f32.mrf.mxu0
        %v1747 = vadd.f32 0.0, %v1746
        %1748 = vmatmul.bf16.gmra.mxu0 %v1662
        %v1749 = vpop.f32.mrf.mxu0
        %v1750 = vadd.f32 0.0, %v1749
        %v1751 = vpop.f32.mrf.mxu0
        %v1752 = vadd.f32 0.0, %v1751
        %1753 = vmatmul.bf16.gmra.mxu0 %v1665
        %v1754 = vpop.f32.mrf.mxu0
        %v1755 = vadd.f32 0.0, %v1754
        %v1756 = vpop.f32.mrf.mxu0
        %v1757 = vadd.f32 0.0, %v1756
        %1758 = vmatmul.bf16.gmra.mxu0 %v1668
        %v1759 = vpop.f32.mrf.mxu0
        %v1760 = vadd.f32 0.0, %v1759
        %v1761 = vpop.f32.mrf.mxu0
        %v1762 = vadd.f32 0.0, %v1761
        %1763 = vmatmul.bf16.gmra.mxu0 %v1671
        %v1764 = vpop.f32.mrf.mxu0
        %v1765 = vadd.f32 0.0, %v1764
        %v1766 = vpop.f32.mrf.mxu0
        %v1767 = vadd.f32 0.0, %v1766
        %1768 = vmatmul.bf16.gmra.mxu0 %v1674
        %v1769 = vpop.f32.mrf.mxu0
        %v1770 = vadd.f32 0.0, %v1769
        %v1771 = vpop.f32.mrf.mxu0
        %v1772 = vadd.f32 0.0, %v1771
        %1773 = vdwg.mxu0
        %v1774 = vadd.f32 %v1588, %v1686
        %v1775 = vadd.f32 %v1589, %v1735
        %v1776 = vadd.f32 %v1590, %v1688
        %v1777 = vadd.f32 %v1591, %v1737
        %v1778 = vadd.f32 %v1592, %v1691
        %v1779 = vadd.f32 %v1593, %v1740
        %v1780 = vadd.f32 %v1594, %v1693
        %v1781 = vadd.f32 %v1595, %v1742
        %v1782 = vadd.f32 %v1596, %v1696
        %v1783 = vadd.f32 %v1597, %v1745
        %v1784 = vadd.f32 %v1598, %v1698
        %v1785 = vadd.f32 %v1599, %v1747
        %v1786 = vadd.f32 %v1600, %v1701
        %v1787 = vadd.f32 %v1601, %v1750
        %v1788 = vadd.f32 %v1602, %v1703
        %v1789 = vadd.f32 %v1603, %v1752
        %v1790 = vadd.f32 %v1604, %v1706
        %v1791 = vadd.f32 %v1605, %v1755
        %v1792 = vadd.f32 %v1606, %v1708
        %v1793 = vadd.f32 %v1607, %v1757
        %v1794 = vadd.f32 %v1608, %v1711
        %v1795 = vadd.f32 %v1609, %v1760
        %v1796 = vadd.f32 %v1610, %v1713
        %v1797 = vadd.f32 %v1611, %v1762
        %v1798 = vadd.f32 %v1612, %v1716
        %v1799 = vadd.f32 %v1613, %v1765
        %v1800 = vadd.f32 %v1614, %v1718
        %v1801 = vadd.f32 %v1615, %v1767
        %v1802 = vadd.f32 %v1616, %v1721
        %v1803 = vadd.f32 %v1617, %v1770
        %v1804 = vadd.f32 %v1618, %v1723
        %v1805 = vadd.f32 %v1619, %v1772
        %1806 = vst [vmem:[#allocation2] sm:$0xff] %v1774
        %1807 = vst [vmem:[#allocation2 + $0x8] sm:$0xff] %v1775
        %1808 = vst [vmem:[#allocation2 + $0x10] sm:$0xff] %v1776
        %1809 = vst [vmem:[#allocation2 + $0x18] sm:$0xff] %v1777
        %1810 = vst [vmem:[#allocation2 + $0x20] sm:$0xff] %v1778
        %1811 = vst [vmem:[#allocation2 + $0x28] sm:$0xff] %v1779
        %1812 = vst [vmem:[#allocation2 + $0x30] sm:$0xff] %v1780
        %1813 = vst [vmem:[#allocation2 + $0x38] sm:$0xff] %v1781
        %1814 = vst [vmem:[#allocation2 + $0x40] sm:$0xff] %v1782
        %1815 = vst [vmem:[#allocation2 + $0x48] sm:$0xff] %v1783
        %1816 = vst [vmem:[#allocation2 + $0x50] sm:$0xff] %v1784
        %1817 = vst [vmem:[#allocation2 + $0x58] sm:$0xff] %v1785
        %1818 = vst [vmem:[#allocation2 + $0x60] sm:$0xff] %v1786
        %1819 = vst [vmem:[#allocation2 + $0x68] sm:$0xff] %v1787
        %1820 = vst [vmem:[#allocation2 + $0x70] sm:$0xff] %v1788
        %1821 = vst [vmem:[#allocation2 + $0x78] sm:$0xff] %v1789
        %1822 = vst [vmem:[#allocation2 + $0x80] sm:$0xff] %v1790
        %1823 = vst [vmem:[#allocation2 + $0x88] sm:$0xff] %v1791
        %1824 = vst [vmem:[#allocation2 + $0x90] sm:$0xff] %v1792
        %1825 = vst [vmem:[#allocation2 + $0x98] sm:$0xff] %v1793
        %1826 = vst [vmem:[#allocation2 + $0xa0] sm:$0xff] %v1794
        %1827 = vst [vmem:[#allocation2 + $0xa8] sm:$0xff] %v1795
        %1828 = vst [vmem:[#allocation2 + $0xb0] sm:$0xff] %v1796
        %1829 = vst [vmem:[#allocation2 + $0xb8] sm:$0xff] %v1797
        %1830 = vst [vmem:[#allocation2 + $0xc0] sm:$0xff] %v1798
        %1831 = vst [vmem:[#allocation2 + $0xc8] sm:$0xff] %v1799
        %1832 = vst [vmem:[#allocation2 + $0xd0] sm:$0xff] %v1800
        %1833 = vst [vmem:[#allocation2 + $0xd8] sm:$0xff] %v1801
        %1834 = vst [vmem:[#allocation2 + $0xe0] sm:$0xff] %v1802
        %1835 = vst [vmem:[#allocation2 + $0xe8] sm:$0xff] %v1803
        %1836 = vst [vmem:[#allocation2 + $0xf0] sm:$0xff] %v1804
        %1837 = vst [vmem:[#allocation2 + $0xf8] sm:$0xff] %v1805
        %p1838 = scmp.eq.s32.totalorder %s27, 7
        // Predicated region
        $region49: #{tpu_custom_call.1} parent=43 // pred_check
          %p1839 = pneg %p1838
        $region50: #{tpu_custom_call.1} parent=43 // pred_check_branch
          %1841 = sbr.rel (%p1839) target = $region52
        $region51: #{tpu_custom_call.1} parent=43 // pred_region
          %v1842 = vld [vmem:[#allocation2] sm:$0xff]
          %v1843 = vld [vmem:[#allocation2 + $0x8] sm:$0xff]
          %v1844 = vld [vmem:[#allocation2 + $0x10] sm:$0xff]
          %v1845 = vld [vmem:[#allocation2 + $0x18] sm:$0xff]
          %v1846 = vld [vmem:[#allocation2 + $0x20] sm:$0xff]
          %v1847 = vld [vmem:[#allocation2 + $0x28] sm:$0xff]
          %v1848 = vld [vmem:[#allocation2 + $0x30] sm:$0xff]
          %v1849 = vld [vmem:[#allocation2 + $0x38] sm:$0xff]
          %v1850 = vld [vmem:[#allocation2 + $0x40] sm:$0xff]
          %v1851 = vld [vmem:[#allocation2 + $0x48] sm:$0xff]
          %v1852 = vld [vmem:[#allocation2 + $0x50] sm:$0xff]
          %v1853 = vld [vmem:[#allocation2 + $0x58] sm:$0xff]
          %v1854 = vld [vmem:[#allocation2 + $0x60] sm:$0xff]
          %v1855 = vld [vmem:[#allocation2 + $0x68] sm:$0xff]
          %v1856 = vld [vmem:[#allocation2 + $0x70] sm:$0xff]
          %v1857 = vld [vmem:[#allocation2 + $0x78] sm:$0xff]
          %v1858 = vld [vmem:[#allocation2 + $0x80] sm:$0xff]
          %v1859 = vld [vmem:[#allocation2 + $0x88] sm:$0xff]
          %v1860 = vld [vmem:[#allocation2 + $0x90] sm:$0xff]
          %v1861 = vld [vmem:[#allocation2 + $0x98] sm:$0xff]
          %v1862 = vld [vmem:[#allocation2 + $0xa0] sm:$0xff]
          %v1863 = vld [vmem:[#allocation2 + $0xa8] sm:$0xff]
          %v1864 = vld [vmem:[#allocation2 + $0xb0] sm:$0xff]
          %v1865 = vld [vmem:[#allocation2 + $0xb8] sm:$0xff]
          %v1866 = vld [vmem:[#allocation2 + $0xc0] sm:$0xff]
          %v1867 = vld [vmem:[#allocation2 + $0xc8] sm:$0xff]
          %v1868 = vld [vmem:[#allocation2 + $0xd0] sm:$0xff]
          %v1869 = vld [vmem:[#allocation2 + $0xd8] sm:$0xff]
          %v1870 = vld [vmem:[#allocation2 + $0xe0] sm:$0xff]
          %v1871 = vld [vmem:[#allocation2 + $0xe8] sm:$0xff]
          %v1872 = vld [vmem:[#allocation2 + $0xf0] sm:$0xff]
          %v1873 = vld [vmem:[#allocation2 + $0xf8] sm:$0xff]
          %v1874 = vld [vmem:[%s5] sm:$0x3]
          %v1876 = vperm.slane %v1874, 0
          %v1877 = vperm.slane %v1874, 1
          %v1880 = vadd.f32 %v1842, %v1876
          %v1881 = vadd.f32 %v1843, %v1877
          %v1882 = vadd.f32 %v1844, %v1876
          %v1883 = vadd.f32 %v1845, %v1877
          %v1884 = vadd.f32 %v1846, %v1876
          %v1885 = vadd.f32 %v1847, %v1877
          %v1886 = vadd.f32 %v1848, %v1876
          %v1887 = vadd.f32 %v1849, %v1877
          %v1888 = vadd.f32 %v1850, %v1876
          %v1889 = vadd.f32 %v1851, %v1877
          %v1890 = vadd.f32 %v1852, %v1876
          %v1891 = vadd.f32 %v1853, %v1877
          %v1892 = vadd.f32 %v1854, %v1876
          %v1893 = vadd.f32 %v1855, %v1877
          %v1894 = vadd.f32 %v1856, %v1876
          %v1895 = vadd.f32 %v1857, %v1877
          %v1896 = vadd.f32 %v1858, %v1876
          %v1897 = vadd.f32 %v1859, %v1877
          %v1898 = vadd.f32 %v1860, %v1876
          %v1899 = vadd.f32 %v1861, %v1877
          %v1900 = vadd.f32 %v1862, %v1876
          %v1901 = vadd.f32 %v1863, %v1877
          %v1902 = vadd.f32 %v1864, %v1876
          %v1903 = vadd.f32 %v1865, %v1877
          %v1904 = vadd.f32 %v1866, %v1876
          %v1905 = vadd.f32 %v1867, %v1877
          %v1906 = vadd.f32 %v1868, %v1876
          %v1907 = vadd.f32 %v1869, %v1877
          %v1908 = vadd.f32 %v1870, %v1876
          %v1909 = vadd.f32 %v1871, %v1877
          %v1910 = vadd.f32 %v1872, %v1876
          %v1911 = vadd.f32 %v1873, %v1877
          %1912 = vst [vmem:[%s325] sm:$0xff] %v1880
          %1913 = vst [vmem:[%s325 + $0x8] sm:$0xff] %v1881
          %1914 = vst [vmem:[%s325 + $0x10] sm:$0xff] %v1882
          %1915 = vst [vmem:[%s325 + $0x18] sm:$0xff] %v1883
          %1916 = vst [vmem:[%s325 + $0x20] sm:$0xff] %v1884
          %1917 = vst [vmem:[%s325 + $0x28] sm:$0xff] %v1885
          %1918 = vst [vmem:[%s325 + $0x30] sm:$0xff] %v1886
          %1919 = vst [vmem:[%s325 + $0x38] sm:$0xff] %v1887
          %1920 = vst [vmem:[%s325 + $0x40] sm:$0xff] %v1888
          %1921 = vst [vmem:[%s325 + $0x48] sm:$0xff] %v1889
          %1922 = vst [vmem:[%s325 + $0x50] sm:$0xff] %v1890
          %1923 = vst [vmem:[%s325 + $0x58] sm:$0xff] %v1891
          %1924 = vst [vmem:[%s325 + $0x60] sm:$0xff] %v1892
          %1925 = vst [vmem:[%s325 + $0x68] sm:$0xff] %v1893
          %1926 = vst [vmem:[%s325 + $0x70] sm:$0xff] %v1894
          %1927 = vst [vmem:[%s325 + $0x78] sm:$0xff] %v1895
          %1928 = vst [vmem:[%s325 + $0x80] sm:$0xff] %v1896
          %1929 = vst [vmem:[%s325 + $0x88] sm:$0xff] %v1897
          %1930 = vst [vmem:[%s325 + $0x90] sm:$0xff] %v1898
          %1931 = vst [vmem:[%s325 + $0x98] sm:$0xff] %v1899
          %1932 = vst [vmem:[%s325 + $0xa0] sm:$0xff] %v1900
          %1933 = vst [vmem:[%s325 + $0xa8] sm:$0xff] %v1901
          %1934 = vst [vmem:[%s325 + $0xb0] sm:$0xff] %v1902
          %1935 = vst [vmem:[%s325 + $0xb8] sm:$0xff] %v1903
          %1936 = vst [vmem:[%s325 + $0xc0] sm:$0xff] %v1904
          %1937 = vst [vmem:[%s325 + $0xc8] sm:$0xff] %v1905
          %1938 = vst [vmem:[%s325 + $0xd0] sm:$0xff] %v1906
          %1939 = vst [vmem:[%s325 + $0xd8] sm:$0xff] %v1907
          %1940 = vst [vmem:[%s325 + $0xe0] sm:$0xff] %v1908
          %1941 = vst [vmem:[%s325 + $0xe8] sm:$0xff] %v1909
          %1942 = vst [vmem:[%s325 + $0xf0] sm:$0xff] %v1910
          %1943 = vst [vmem:[%s325 + $0xf8] sm:$0xff] %v1911
        $region52: #{tpu_custom_call.1} parent=43 // pred_fallthru
          _
        %s1944 = sand.u32 %s200, 1
        %s1945 = scalar_lea.sflag [#allocation4], %s1944
        %s1946 = sand.u32 %s200, 1
        %s1947 = smul.addr %s1946, 256
        %s1948 = scalar_lea.vmem [#allocation3], %s1947
        // Predicated region
        $region53: #{tpu_custom_call.1} parent=43 // pred_check
          %p1949 = pneg %p210
        $region54: #{tpu_custom_call.1} parent=43 // pred_check_branch
          %1951 = sbr.rel (%p1949) target = $region56
        $region55: #{tpu_custom_call.1} parent=43 // pred_region
          %s1952 = smul.u32 16, %s26
          %1954 = vsyncadd %s1945, 0
          %s1955 = smul.addr %s1952, 2
          %s1956 = smul.addr %s25, 32
          %s1957 = sadd.s32 %s1955, %s1956
          %s1958 = smul.addr %s1957, 8
          %s1959 = scalar_lea.hbm %s6, %s1958
          %s1960 = sshll.u32 %s1948, 4
          %s1961 = int_to_ptr.vmem [resolvable:$true] %s1960
          %s1962 = sshll.u32 %s1959, 4
          %s1963 = int_to_ptr.hbm [resolvable:$true] %s1962
          %1968 = dma.vmem_to_hbm [thread:$0]  %s1961, 4096, %s1963, %s1945, 256, 256, 16
        $region56: #{tpu_custom_call.1} parent=43 // pred_fallthru
          _
      $region44: #{tpu_custom_call.1} parent=5 // pred_fallthru
        _
      %p1969 = scmp.le.s32.totalorder 2, %s15
      // Predicated region
      $region57: #{tpu_custom_call.1} parent=5 // pred_check
        %p1970 = pneg %p1969
      $region58: #{tpu_custom_call.1} parent=5 // pred_check_branch
        %1972 = sbr.rel (%p1970) target = $region60
      $region59: #{tpu_custom_call.1} parent=5 // pred_region
        %s1973 = ssub.s32 %s15, 2
        // Predicated region
        $region61: #{tpu_custom_call.1} parent=59 // pred_check
          %p1974 = pneg %p216
        $region62: #{tpu_custom_call.1} parent=59 // pred_check_branch
          %1976 = sbr.rel (%p1974) target = $region64
        $region63: #{tpu_custom_call.1} parent=59 // pred_region
          %s1977 = sand.u32 %s201, 1
          %s1978 = scalar_lea.sflag [#allocation4], %s1977
          %s1979 = sand.u32 %s201, 1
          %s1980 = smul.addr %s1979, 256
          %s1981 = scalar_lea.vmem [#allocation3], %s1980
          %1983 = dma.done %s1978, 4096
        $region64: #{tpu_custom_call.1} parent=59 // pred_fallthru
          _
      $region60: #{tpu_custom_call.1} parent=5 // pred_fallthru
        _
    $region6: #{tpu_custom_call.1} parent=1 // loop_footer
      %s19 = sadd.s32 1, %s15
    $region7: #{tpu_custom_call.1} parent=1 // loop_footer_branch
      %14 = sbr.rel target = $region3
    $region8: #{tpu_custom_call.1} parent=1 // loop_exit
      _
    %1984 = vsyncpa [#allocation4], 1
    %s1985 = scalar_lea.sflag [#allocation4], 1
    %1986 = vsyncpa %s1985, 1

</llo_original>
